<compile_context>
chip_gen: v6e
topology: v6e:2x2x1
jax: 0.10.0
libtpu: 0.0.40
codegen_flags: <defaults>
</compile_context>

<pallas_src>
import functools

import jax
import jax.numpy as jnp
from jax import lax
from jax.experimental import pallas as pl
from jax.experimental.pallas import tpu as pltpu


# ---------------------------------------------------------------------------
# Pallas kernel: whole model (stacked LSTM + FC) in one invocation
# ---------------------------------------------------------------------------
def _fused_lstm_fc_kernel(num_layers, T, B, H, gx0_ref, *refs):
    """Single-pass stacked LSTM + FC.

    gx0_ref : (T, B, 4H)  precomputed x @ W_ih0 + b0 for every timestep
    refs    : whh0 (H, 4H),
              [w_ih_l (H, 4H), w_hh_l (H, 4H), b_l (1, 4H)] for l = 1..L-1,
              w_fc (H, O), b_fc (1, O),
              out_ref (B, O)
    """
    H4 = 4 * H

    # ---- hoist all weight loads / bias broadcasts out of the time loop ----
    idx = 0
    whh0 = refs[idx][...]
    idx += 1
    upper = []
    for _ in range(num_layers - 1):
        w_ih = refs[idx][...]
        w_hh = refs[idx + 1][...]
        b = jnp.broadcast_to(refs[idx + 2][...], (B, H4))
        upper.append((w_ih, w_hh, b))
        idx += 3
    w_fc_ref = refs[idx]
    b_fc_ref = refs[idx + 1]
    out_ref = refs[idx + 2]

    def cell(gates, c_prev):
        # PyTorch gate order: i, f, g, o
        i_g = jax.nn.sigmoid(gates[:, 0 * H:1 * H])
        f_g = jax.nn.sigmoid(gates[:, 1 * H:2 * H])
        g_g = jnp.tanh(gates[:, 2 * H:3 * H])
        o_g = jax.nn.sigmoid(gates[:, 3 * H:4 * H])
        c_new = f_g * c_prev + i_g * g_g
        h_new = o_g * jnp.tanh(c_new)
        return h_new, c_new

    def step(t, carry):
        hs, cs = carry
        # Layer 0: input gates precomputed for all timesteps; the recurrent
        # critical path is a single small h_prev @ W_hh matmul + gate math.
        g0 = gx0_ref[t] + jnp.dot(hs[0], whh0, preferred_element_type=jnp.float32)
        h_new, c_new = cell(g0, cs[0])
        new_h, new_c = [h_new], [c_new]
        x_in = h_new
        for l in range(1, num_layers):
            w_ih, w_hh, b = upper[l - 1]
            # NOTE: could fuse into one dot via concat([x_in, h]) @ [W_ih; W_hh];
            # kept as two tiny dots (negligible at these shapes, simpler lowering).
            g = (jnp.dot(x_in, w_ih, preferred_element_type=jnp.float32)
                 + jnp.dot(hs[l], w_hh, preferred_element_type=jnp.float32)
                 + b)
            h_l, c_l = cell(g, cs[l])
            new_h.append(h_l)
            new_c.append(c_l)
            x_in = h_l
        return tuple(new_h), tuple(new_c)

    zeros = jnp.zeros((B, H), jnp.float32)
    init = (tuple(zeros for _ in range(num_layers)),
            tuple(zeros for _ in range(num_layers)))
    hs, _ = lax.fori_loop(0, T, step, init, unroll=(T <= 32))

    # FC head on the last timestep of the top layer only.
    out_ref[...] = (
        jnp.dot(hs[-1], w_fc_ref[...], preferred_element_type=jnp.float32)
        + b_fc_ref[...]
    ).astype(out_ref.dtype)


# ---------------------------------------------------------------------------
# Wrapper
# ---------------------------------------------------------------------------
@jax.jit
def lstm_model_forward(x, params):
    """x: (B, T, input_size) batch_first, like PyTorch. Returns (B, output_size)."""
    B, T, F = x.shape
    lstm_layers = params["lstm"]
    num_layers = len(lstm_layers)
    H = lstm_layers[0]["w_hh_t"].shape[0]
    H4 = 4 * H
    O = params["fc"]["w_t"].shape[1]

    # Hoisted layer-0 input projection: one MXU-friendly batched matmul (+bias),
    # done by XLA outside the recurrence, reshaped to (T, B, 4H) time-major.
    x_tm = jnp.transpose(x, (1, 0, 2))                           # (T, B, F)
    l0 = lstm_layers[0]
    gx0 = (x_tm.reshape(T * B, F) @ l0["w_ih_t"] + l0["bias"]).reshape(T, B, H4)
    gx0 = gx0.astype(jnp.float32)

    in_arrays = [gx0, l0["w_hh_t"]]
    for layer in lstm_layers[1:]:
        in_arrays += [layer["w_ih_t"], layer["w_hh_t"], layer["bias"]]
    in_arrays += [params["fc"]["w_t"], params["fc"]["b"]]

    # Full-array blocks everywhere (shapes are tiny; block == full array dims).
    in_specs = [
        pl.BlockSpec(a.shape, lambda i, n=a.ndim: (0,) * n) for a in in_arrays
    ]

    kernel = functools.partial(_fused_lstm_fc_kernel, num_layers, T, B, H)
    return pl.pallas_call(
        kernel,
        out_shape=jax.ShapeDtypeStruct((B, O), jnp.float32),
        grid_spec=pltpu.PrefetchScalarGridSpec(
            num_scalar_prefetch=0,
            grid=(1,),
            in_specs=in_specs,
            out_specs=pl.BlockSpec((B, O), lambda i: (0, 0)),
        ),
        compiler_params=pltpu.CompilerParams(
            dimension_semantics=("arbitrary",),
        ),
    )(*in_arrays)


# ---------------------------------------------------------------------------
# Pure-JAX reference (for verification)
# ---------------------------------------------------------------------------
def lstm_model_reference(x, params):
    h_seq = jnp.transpose(x, (1, 0, 2))  # (T, B, F)
    for layer in params["lstm"]:
        w_ih_t, w_hh_t, bias = layer["w_ih_t"], layer["w_hh_t"], layer["bias"]
        B = h_seq.shape[1]
        H = w_hh_t.shape[0]

        def step(carry, x_t):
            h, c = carry
            gates = x_t @ w_ih_t + h @ w_hh_t + bias
            i_g = jax.nn.sigmoid(gates[:, 0 * H:1 * H])
            f_g = jax.nn.sigmoid(gates[:, 1 * H:2 * H])
            g_g = jnp.tanh(gates[:, 2 * H:3 * H])
            o_g = jax.nn.sigmoid(gates[:, 3 * H:4 * H])
            c_new = f_g * c + i_g * g_g
            h_new = o_g * jnp.tanh(c_new)
            return (h_new, c_new), h_new

        init = (jnp.zeros((B, H), jnp.float32), jnp.zeros((B, H), jnp.float32))
        _, h_seq = lax.scan(step, init, h_seq)
    return h_seq[-1] @ params["fc"]["w_t"] + params["fc"]["b"]


# ---------------------------------------------------------------------------
# Deterministic parameter init (PyTorch-style uniform(-1/sqrt(H), 1/sqrt(H)))
# ---------------------------------------------------------------------------
def init_params(key, input_size, hidden_size, num_layers, output_size):
    bound = 1.0 / jnp.sqrt(hidden_size)
    params = {"lstm": []}
    for l in range(num_layers):
        in_f = input_size if l == 0 else hidden_size
        key, k1, k2, k3, k4 = jax.random.split(key, 5)
        w_ih = jax.random.uniform(k1, (4 * hidden_size, in_f), jnp.float32, -bound, bound)
        w_hh = jax.random.uniform(k2, (4 * hidden_size, hidden_size), jnp.float32, -bound, bound)
        b_ih = jax.random.uniform(k3, (4 * hidden_size,), jnp.float32, -bound, bound)
        b_hh = jax.random.uniform(k4, (4 * hidden_size,), jnp.float32, -bound, bound)
        params["lstm"].append(
            {
                "w_ih_t": w_ih.T,                      # (in_f, 4H)
                "w_hh_t": w_hh.T,                      # (H, 4H)
                "bias": (b_ih + b_hh)[None, :],        # (1, 4H)
            }
        )
    key, k5, k6 = jax.random.split(key, 3)
    fc_bound = 1.0 / jnp.sqrt(hidden_size)
    w_fc = jax.random.uniform(k5, (output_size, hidden_size), jnp.float32, -fc_bound, fc_bound)
    b_fc = jax.random.uniform(k6, (output_size,), jnp.float32, -fc_bound, fc_bound)
    params["fc"] = {"w_t": w_fc.T, "b": b_fc[None, :]}  # (H, O), (1, O)
    return params


if __name__ == "__main__":
    # Small shapes implied by the module's forward: x is (batch, seq, input_size)
    B, T = 2, 8
    input_size, hidden_size, num_layers, output_size = 16, 32, 2, 8

    key = jax.random.PRNGKey(0)
    key, xk = jax.random.split(key)
    x = jax.random.normal(xk, (B, T, input_size), dtype=jnp.float32)

    params = init_params(key, input_size, hidden_size, num_layers, output_size)

    out = lstm_model_forward(x, params)
    jax.block_until_ready(out)
    assert out.shape == (B, output_size), out.shape

    ref = lstm_model_reference(x, params)
    assert jnp.allclose(out, ref, atol=1e-5, rtol=1e-5), (
        "mismatch vs pure-JAX reference: "
        f"max abs diff {jnp.max(jnp.abs(out - ref))}"
    )

    print("KERNEL_OK")
</pallas_src>

<mosaic_0001>
module attributes {stable_mosaic.version = 11 : i64} {
  func.func @_fused_lstm_fc_kernel(%arg0: i32, %arg1: memref<8x2x128xf32, #tpu.memory_space<vmem>>, %arg2: memref<32x128xf32, #tpu.memory_space<vmem>>, %arg3: memref<32x128xf32, #tpu.memory_space<vmem>>, %arg4: memref<32x128xf32, #tpu.memory_space<vmem>>, %arg5: memref<1x128xf32, #tpu.memory_space<vmem>>, %arg6: memref<32x8xf32, #tpu.memory_space<vmem>>, %arg7: memref<1x8xf32, #tpu.memory_space<vmem>>, %arg8: memref<2x8xf32, #tpu.memory_space<vmem>>) attributes {dimension_semantics = [#tpu.dimension_semantics<arbitrary>], iteration_bounds = array<i64: 1>, scalar_prefetch = 0 : i64, scratch_operands = 0 : i64, tpu.core_type = #tpu.core_type<tc>, window_params = [{pipeline_mode = #tpu.pipeline_mode<synchronous>, transform_indices = @transform_0, window_bounds = array<i64: 8, 2, 128>}, {pipeline_mode = #tpu.pipeline_mode<synchronous>, transform_indices = @transform_1, window_bounds = array<i64: 32, 128>}, {pipeline_mode = #tpu.pipeline_mode<synchronous>, transform_indices = @transform_2, window_bounds = array<i64: 32, 128>}, {pipeline_mode = #tpu.pipeline_mode<synchronous>, transform_indices = @transform_3, window_bounds = array<i64: 32, 128>}, {pipeline_mode = #tpu.pipeline_mode<synchronous>, transform_indices = @transform_4, window_bounds = array<i64: 1, 128>}, {pipeline_mode = #tpu.pipeline_mode<synchronous>, transform_indices = @transform_5, window_bounds = array<i64: 32, 8>}, {pipeline_mode = #tpu.pipeline_mode<synchronous>, transform_indices = @transform_6, window_bounds = array<i64: 1, 8>}, {pipeline_mode = #tpu.pipeline_mode<synchronous>, transform_indices = @transform_7, window_bounds = array<i64: 2, 8>}]} {
    %c0 = arith.constant 0 : index
    %c0_0 = arith.constant 0 : index
    %0 = vector.load %arg2[%c0, %c0_0] : memref<32x128xf32, #tpu.memory_space<vmem>>, vector<32x128xf32>
    %c0_1 = arith.constant 0 : index
    %c0_2 = arith.constant 0 : index
    %1 = vector.load %arg3[%c0_1, %c0_2] : memref<32x128xf32, #tpu.memory_space<vmem>>, vector<32x128xf32>
    %c0_3 = arith.constant 0 : index
    %c0_4 = arith.constant 0 : index
    %2 = vector.load %arg4[%c0_3, %c0_4] : memref<32x128xf32, #tpu.memory_space<vmem>>, vector<32x128xf32>
    %c0_5 = arith.constant 0 : index
    %c0_6 = arith.constant 0 : index
    %3 = vector.load %arg5[%c0_5, %c0_6] : memref<1x128xf32, #tpu.memory_space<vmem>>, vector<1x128xf32>
    %4 = vector.shape_cast %3 : vector<1x128xf32> to vector<1x128xf32>
    %5 = vector.broadcast %4 : vector<1x128xf32> to vector<2x128xf32>
    %cst = arith.constant 0.000000e+00 : f32
    %6 = vector.broadcast %cst : f32 to vector<2x32xf32>
    %c0_i32 = arith.constant 0 : i32
    %7 = arith.index_cast %c0_i32 : i32 to index
    %c0_7 = arith.constant 0 : index
    %c0_8 = arith.constant 0 : index
    %8 = vector.load %arg1[%7, %c0_7, %c0_8] : memref<8x2x128xf32, #tpu.memory_space<vmem>>, vector<1x2x128xf32>
    %9 = vector.shape_cast %8 : vector<1x2x128xf32> to vector<2x128xf32>
    %cst_9 = arith.constant dense<0.000000e+00> : vector<2x128xf32>
    %10 = tpu.matmul %6, %0, %cst_9 {dimension_numbers = #tpu.dot_dimension_numbers<[1], [0], [0], [1], [0, 0, 1, 1], [], []>} : vector<2x32xf32>, vector<32x128xf32>, vector<2x128xf32> -> vector<2x128xf32>
    %11 = arith.addf %9, %10 : vector<2x128xf32>
    %12 = vector.extract_strided_slice %11 {offsets = [0, 0], sizes = [2, 32], strides = [1, 1]} : vector<2x128xf32> to vector<2x32xf32>
    %13 = arith.negf %12 : vector<2x32xf32>
    %14 = math.exp %13 : vector<2x32xf32>
    %cst_10 = arith.constant 1.000000e+00 : f32
    %15 = vector.broadcast %cst_10 : f32 to vector<2x32xf32>
    %16 = arith.addf %15, %14 : vector<2x32xf32>
    %17 = arith.divf %15, %16 : vector<2x32xf32>
    %18 = vector.extract_strided_slice %11 {offsets = [0, 32], sizes = [2, 32], strides = [1, 1]} : vector<2x128xf32> to vector<2x32xf32>
    %19 = arith.negf %18 : vector<2x32xf32>
    %20 = math.exp %19 : vector<2x32xf32>
    %cst_11 = arith.constant 1.000000e+00 : f32
    %21 = vector.broadcast %cst_11 : f32 to vector<2x32xf32>
    %22 = arith.addf %21, %20 : vector<2x32xf32>
    %23 = arith.divf %21, %22 : vector<2x32xf32>
    %24 = vector.extract_strided_slice %11 {offsets = [0, 64], sizes = [2, 32], strides = [1, 1]} : vector<2x128xf32> to vector<2x32xf32>
    %25 = math.tanh %24 : vector<2x32xf32>
    %26 = vector.extract_strided_slice %11 {offsets = [0, 96], sizes = [2, 32], strides = [1, 1]} : vector<2x128xf32> to vector<2x32xf32>
    %27 = arith.negf %26 : vector<2x32xf32>
    %28 = math.exp %27 : vector<2x32xf32>
    %cst_12 = arith.constant 1.000000e+00 : f32
    %29 = vector.broadcast %cst_12 : f32 to vector<2x32xf32>
    %30 = arith.addf %29, %28 : vector<2x32xf32>
    %31 = arith.divf %29, %30 : vector<2x32xf32>
    %32 = arith.mulf %23, %6 : vector<2x32xf32>
    %33 = arith.mulf %17, %25 : vector<2x32xf32>
    %34 = arith.addf %32, %33 : vector<2x32xf32>
    %35 = math.tanh %34 : vector<2x32xf32>
    %36 = arith.mulf %31, %35 : vector<2x32xf32>
    %cst_13 = arith.constant dense<0.000000e+00> : vector<2x128xf32>
    %37 = tpu.matmul %36, %1, %cst_13 {dimension_numbers = #tpu.dot_dimension_numbers<[1], [0], [0], [1], [0, 0, 1, 1], [], []>} : vector<2x32xf32>, vector<32x128xf32>, vector<2x128xf32> -> vector<2x128xf32>
    %cst_14 = arith.constant dense<0.000000e+00> : vector<2x128xf32>
    %38 = tpu.matmul %6, %2, %cst_14 {dimension_numbers = #tpu.dot_dimension_numbers<[1], [0], [0], [1], [0, 0, 1, 1], [], []>} : vector<2x32xf32>, vector<32x128xf32>, vector<2x128xf32> -> vector<2x128xf32>
    %39 = arith.addf %37, %38 : vector<2x128xf32>
    %40 = arith.addf %39, %5 : vector<2x128xf32>
    %41 = vector.extract_strided_slice %40 {offsets = [0, 0], sizes = [2, 32], strides = [1, 1]} : vector<2x128xf32> to vector<2x32xf32>
    %42 = arith.negf %41 : vector<2x32xf32>
    %43 = math.exp %42 : vector<2x32xf32>
    %cst_15 = arith.constant 1.000000e+00 : f32
    %44 = vector.broadcast %cst_15 : f32 to vector<2x32xf32>
    %45 = arith.addf %44, %43 : vector<2x32xf32>
    %46 = arith.divf %44, %45 : vector<2x32xf32>
    %47 = vector.extract_strided_slice %40 {offsets = [0, 32], sizes = [2, 32], strides = [1, 1]} : vector<2x128xf32> to vector<2x32xf32>
    %48 = arith.negf %47 : vector<2x32xf32>
    %49 = math.exp %48 : vector<2x32xf32>
    %cst_16 = arith.constant 1.000000e+00 : f32
    %50 = vector.broadcast %cst_16 : f32 to vector<2x32xf32>
    %51 = arith.addf %50, %49 : vector<2x32xf32>
    %52 = arith.divf %50, %51 : vector<2x32xf32>
    %53 = vector.extract_strided_slice %40 {offsets = [0, 64], sizes = [2, 32], strides = [1, 1]} : vector<2x128xf32> to vector<2x32xf32>
    %54 = math.tanh %53 : vector<2x32xf32>
    %55 = vector.extract_strided_slice %40 {offsets = [0, 96], sizes = [2, 32], strides = [1, 1]} : vector<2x128xf32> to vector<2x32xf32>
    %56 = arith.negf %55 : vector<2x32xf32>
    %57 = math.exp %56 : vector<2x32xf32>
    %cst_17 = arith.constant 1.000000e+00 : f32
    %58 = vector.broadcast %cst_17 : f32 to vector<2x32xf32>
    %59 = arith.addf %58, %57 : vector<2x32xf32>
    %60 = arith.divf %58, %59 : vector<2x32xf32>
    %61 = arith.mulf %52, %6 : vector<2x32xf32>
    %62 = arith.mulf %46, %54 : vector<2x32xf32>
    %63 = arith.addf %61, %62 : vector<2x32xf32>
    %64 = math.tanh %63 : vector<2x32xf32>
    %65 = arith.mulf %60, %64 : vector<2x32xf32>
    %c1_i32 = arith.constant 1 : i32
    %66 = arith.index_cast %c1_i32 : i32 to index
    %c0_18 = arith.constant 0 : index
    %c0_19 = arith.constant 0 : index
    %67 = vector.load %arg1[%66, %c0_18, %c0_19] : memref<8x2x128xf32, #tpu.memory_space<vmem>>, vector<1x2x128xf32>
    %68 = vector.shape_cast %67 : vector<1x2x128xf32> to vector<2x128xf32>
    %cst_20 = arith.constant dense<0.000000e+00> : vector<2x128xf32>
    %69 = tpu.matmul %36, %0, %cst_20 {dimension_numbers = #tpu.dot_dimension_numbers<[1], [0], [0], [1], [0, 0, 1, 1], [], []>} : vector<2x32xf32>, vector<32x128xf32>, vector<2x128xf32> -> vector<2x128xf32>
    %70 = arith.addf %68, %69 : vector<2x128xf32>
    %71 = vector.extract_strided_slice %70 {offsets = [0, 0], sizes = [2, 32], strides = [1, 1]} : vector<2x128xf32> to vector<2x32xf32>
    %72 = arith.negf %71 : vector<2x32xf32>
    %73 = math.exp %72 : vector<2x32xf32>
    %cst_21 = arith.constant 1.000000e+00 : f32
    %74 = vector.broadcast %cst_21 : f32 to vector<2x32xf32>
    %75 = arith.addf %74, %73 : vector<2x32xf32>
    %76 = arith.divf %74, %75 : vector<2x32xf32>
    %77 = vector.extract_strided_slice %70 {offsets = [0, 32], sizes = [2, 32], strides = [1, 1]} : vector<2x128xf32> to vector<2x32xf32>
    %78 = arith.negf %77 : vector<2x32xf32>
    %79 = math.exp %78 : vector<2x32xf32>
    %cst_22 = arith.constant 1.000000e+00 : f32
    %80 = vector.broadcast %cst_22 : f32 to vector<2x32xf32>
    %81 = arith.addf %80, %79 : vector<2x32xf32>
    %82 = arith.divf %80, %81 : vector<2x32xf32>
    %83 = vector.extract_strided_slice %70 {offsets = [0, 64], sizes = [2, 32], strides = [1, 1]} : vector<2x128xf32> to vector<2x32xf32>
    %84 = math.tanh %83 : vector<2x32xf32>
    %85 = vector.extract_strided_slice %70 {offsets = [0, 96], sizes = [2, 32], strides = [1, 1]} : vector<2x128xf32> to vector<2x32xf32>
    %86 = arith.negf %85 : vector<2x32xf32>
    %87 = math.exp %86 : vector<2x32xf32>
    %cst_23 = arith.constant 1.000000e+00 : f32
    %88 = vector.broadcast %cst_23 : f32 to vector<2x32xf32>
    %89 = arith.addf %88, %87 : vector<2x32xf32>
    %90 = arith.divf %88, %89 : vector<2x32xf32>
    %91 = arith.mulf %82, %34 : vector<2x32xf32>
    %92 = arith.mulf %76, %84 : vector<2x32xf32>
    %93 = arith.addf %91, %92 : vector<2x32xf32>
    %94 = math.tanh %93 : vector<2x32xf32>
    %95 = arith.mulf %90, %94 : vector<2x32xf32>
    %cst_24 = arith.constant dense<0.000000e+00> : vector<2x128xf32>
    %96 = tpu.matmul %95, %1, %cst_24 {dimension_numbers = #tpu.dot_dimension_numbers<[1], [0], [0], [1], [0, 0, 1, 1], [], []>} : vector<2x32xf32>, vector<32x128xf32>, vector<2x128xf32> -> vector<2x128xf32>
    %cst_25 = arith.constant dense<0.000000e+00> : vector<2x128xf32>
    %97 = tpu.matmul %65, %2, %cst_25 {dimension_numbers = #tpu.dot_dimension_numbers<[1], [0], [0], [1], [0, 0, 1, 1], [], []>} : vector<2x32xf32>, vector<32x128xf32>, vector<2x128xf32> -> vector<2x128xf32>
    %98 = arith.addf %96, %97 : vector<2x128xf32>
    %99 = arith.addf %98, %5 : vector<2x128xf32>
    %100 = vector.extract_strided_slice %99 {offsets = [0, 0], sizes = [2, 32], strides = [1, 1]} : vector<2x128xf32> to vector<2x32xf32>
    %101 = arith.negf %100 : vector<2x32xf32>
    %102 = math.exp %101 : vector<2x32xf32>
    %cst_26 = arith.constant 1.000000e+00 : f32
    %103 = vector.broadcast %cst_26 : f32 to vector<2x32xf32>
    %104 = arith.addf %103, %102 : vector<2x32xf32>
    %105 = arith.divf %103, %104 : vector<2x32xf32>
    %106 = vector.extract_strided_slice %99 {offsets = [0, 32], sizes = [2, 32], strides = [1, 1]} : vector<2x128xf32> to vector<2x32xf32>
    %107 = arith.negf %106 : vector<2x32xf32>
    %108 = math.exp %107 : vector<2x32xf32>
    %cst_27 = arith.constant 1.000000e+00 : f32
    %109 = vector.broadcast %cst_27 : f32 to vector<2x32xf32>
    %110 = arith.addf %109, %108 : vector<2x32xf32>
    %111 = arith.divf %109, %110 : vector<2x32xf32>
    %112 = vector.extract_strided_slice %99 {offsets = [0, 64], sizes = [2, 32], strides = [1, 1]} : vector<2x128xf32> to vector<2x32xf32>
    %113 = math.tanh %112 : vector<2x32xf32>
    %114 = vector.extract_strided_slice %99 {offsets = [0, 96], sizes = [2, 32], strides = [1, 1]} : vector<2x128xf32> to vector<2x32xf32>
    %115 = arith.negf %114 : vector<2x32xf32>
    %116 = math.exp %115 : vector<2x32xf32>
    %cst_28 = arith.constant 1.000000e+00 : f32
    %117 = vector.broadcast %cst_28 : f32 to vector<2x32xf32>
    %118 = arith.addf %117, %116 : vector<2x32xf32>
    %119 = arith.divf %117, %118 : vector<2x32xf32>
    %120 = arith.mulf %111, %63 : vector<2x32xf32>
    %121 = arith.mulf %105, %113 : vector<2x32xf32>
    %122 = arith.addf %120, %121 : vector<2x32xf32>
    %123 = math.tanh %122 : vector<2x32xf32>
    %124 = arith.mulf %119, %123 : vector<2x32xf32>
    %c2_i32 = arith.constant 2 : i32
    %125 = arith.index_cast %c2_i32 : i32 to index
    %c0_29 = arith.constant 0 : index
    %c0_30 = arith.constant 0 : index
    %126 = vector.load %arg1[%125, %c0_29, %c0_30] : memref<8x2x128xf32, #tpu.memory_space<vmem>>, vector<1x2x128xf32>
    %127 = vector.shape_cast %126 : vector<1x2x128xf32> to vector<2x128xf32>
    %cst_31 = arith.constant dense<0.000000e+00> : vector<2x128xf32>
    %128 = tpu.matmul %95, %0, %cst_31 {dimension_numbers = #tpu.dot_dimension_numbers<[1], [0], [0], [1], [0, 0, 1, 1], [], []>} : vector<2x32xf32>, vector<32x128xf32>, vector<2x128xf32> -> vector<2x128xf32>
    %129 = arith.addf %127, %128 : vector<2x128xf32>
    %130 = vector.extract_strided_slice %129 {offsets = [0, 0], sizes = [2, 32], strides = [1, 1]} : vector<2x128xf32> to vector<2x32xf32>
    %131 = arith.negf %130 : vector<2x32xf32>
    %132 = math.exp %131 : vector<2x32xf32>
    %cst_32 = arith.constant 1.000000e+00 : f32
    %133 = vector.broadcast %cst_32 : f32 to vector<2x32xf32>
    %134 = arith.addf %133, %132 : vector<2x32xf32>
    %135 = arith.divf %133, %134 : vector<2x32xf32>
    %136 = vector.extract_strided_slice %129 {offsets = [0, 32], sizes = [2, 32], strides = [1, 1]} : vector<2x128xf32> to vector<2x32xf32>
    %137 = arith.negf %136 : vector<2x32xf32>
    %138 = math.exp %137 : vector<2x32xf32>
    %cst_33 = arith.constant 1.000000e+00 : f32
    %139 = vector.broadcast %cst_33 : f32 to vector<2x32xf32>
    %140 = arith.addf %139, %138 : vector<2x32xf32>
    %141 = arith.divf %139, %140 : vector<2x32xf32>
    %142 = vector.extract_strided_slice %129 {offsets = [0, 64], sizes = [2, 32], strides = [1, 1]} : vector<2x128xf32> to vector<2x32xf32>
    %143 = math.tanh %142 : vector<2x32xf32>
    %144 = vector.extract_strided_slice %129 {offsets = [0, 96], sizes = [2, 32], strides = [1, 1]} : vector<2x128xf32> to vector<2x32xf32>
    %145 = arith.negf %144 : vector<2x32xf32>
    %146 = math.exp %145 : vector<2x32xf32>
    %cst_34 = arith.constant 1.000000e+00 : f32
    %147 = vector.broadcast %cst_34 : f32 to vector<2x32xf32>
    %148 = arith.addf %147, %146 : vector<2x32xf32>
    %149 = arith.divf %147, %148 : vector<2x32xf32>
    %150 = arith.mulf %141, %93 : vector<2x32xf32>
    %151 = arith.mulf %135, %143 : vector<2x32xf32>
    %152 = arith.addf %150, %151 : vector<2x32xf32>
    %153 = math.tanh %152 : vector<2x32xf32>
    %154 = arith.mulf %149, %153 : vector<2x32xf32>
    %cst_35 = arith.constant dense<0.000000e+00> : vector<2x128xf32>
    %155 = tpu.matmul %154, %1, %cst_35 {dimension_numbers = #tpu.dot_dimension_numbers<[1], [0], [0], [1], [0, 0, 1, 1], [], []>} : vector<2x32xf32>, vector<32x128xf32>, vector<2x128xf32> -> vector<2x128xf32>
    %cst_36 = arith.constant dense<0.000000e+00> : vector<2x128xf32>
    %156 = tpu.matmul %124, %2, %cst_36 {dimension_numbers = #tpu.dot_dimension_numbers<[1], [0], [0], [1], [0, 0, 1, 1], [], []>} : vector<2x32xf32>, vector<32x128xf32>, vector<2x128xf32> -> vector<2x128xf32>
    %157 = arith.addf %155, %156 : vector<2x128xf32>
    %158 = arith.addf %157, %5 : vector<2x128xf32>
    %159 = vector.extract_strided_slice %158 {offsets = [0, 0], sizes = [2, 32], strides = [1, 1]} : vector<2x128xf32> to vector<2x32xf32>
    %160 = arith.negf %159 : vector<2x32xf32>
    %161 = math.exp %160 : vector<2x32xf32>
    %cst_37 = arith.constant 1.000000e+00 : f32
    %162 = vector.broadcast %cst_37 : f32 to vector<2x32xf32>
    %163 = arith.addf %162, %161 : vector<2x32xf32>
    %164 = arith.divf %162, %163 : vector<2x32xf32>
    %165 = vector.extract_strided_slice %158 {offsets = [0, 32], sizes = [2, 32], strides = [1, 1]} : vector<2x128xf32> to vector<2x32xf32>
    %166 = arith.negf %165 : vector<2x32xf32>
    %167 = math.exp %166 : vector<2x32xf32>
    %cst_38 = arith.constant 1.000000e+00 : f32
    %168 = vector.broadcast %cst_38 : f32 to vector<2x32xf32>
    %169 = arith.addf %168, %167 : vector<2x32xf32>
    %170 = arith.divf %168, %169 : vector<2x32xf32>
    %171 = vector.extract_strided_slice %158 {offsets = [0, 64], sizes = [2, 32], strides = [1, 1]} : vector<2x128xf32> to vector<2x32xf32>
    %172 = math.tanh %171 : vector<2x32xf32>
    %173 = vector.extract_strided_slice %158 {offsets = [0, 96], sizes = [2, 32], strides = [1, 1]} : vector<2x128xf32> to vector<2x32xf32>
    %174 = arith.negf %173 : vector<2x32xf32>
    %175 = math.exp %174 : vector<2x32xf32>
    %cst_39 = arith.constant 1.000000e+00 : f32
    %176 = vector.broadcast %cst_39 : f32 to vector<2x32xf32>
    %177 = arith.addf %176, %175 : vector<2x32xf32>
    %178 = arith.divf %176, %177 : vector<2x32xf32>
    %179 = arith.mulf %170, %122 : vector<2x32xf32>
    %180 = arith.mulf %164, %172 : vector<2x32xf32>
    %181 = arith.addf %179, %180 : vector<2x32xf32>
    %182 = math.tanh %181 : vector<2x32xf32>
    %183 = arith.mulf %178, %182 : vector<2x32xf32>
    %c3_i32 = arith.constant 3 : i32
    %184 = arith.index_cast %c3_i32 : i32 to index
    %c0_40 = arith.constant 0 : index
    %c0_41 = arith.constant 0 : index
    %185 = vector.load %arg1[%184, %c0_40, %c0_41] : memref<8x2x128xf32, #tpu.memory_space<vmem>>, vector<1x2x128xf32>
    %186 = vector.shape_cast %185 : vector<1x2x128xf32> to vector<2x128xf32>
    %cst_42 = arith.constant dense<0.000000e+00> : vector<2x128xf32>
    %187 = tpu.matmul %154, %0, %cst_42 {dimension_numbers = #tpu.dot_dimension_numbers<[1], [0], [0], [1], [0, 0, 1, 1], [], []>} : vector<2x32xf32>, vector<32x128xf32>, vector<2x128xf32> -> vector<2x128xf32>
    %188 = arith.addf %186, %187 : vector<2x128xf32>
    %189 = vector.extract_strided_slice %188 {offsets = [0, 0], sizes = [2, 32], strides = [1, 1]} : vector<2x128xf32> to vector<2x32xf32>
    %190 = arith.negf %189 : vector<2x32xf32>
    %191 = math.exp %190 : vector<2x32xf32>
    %cst_43 = arith.constant 1.000000e+00 : f32
    %192 = vector.broadcast %cst_43 : f32 to vector<2x32xf32>
    %193 = arith.addf %192, %191 : vector<2x32xf32>
    %194 = arith.divf %192, %193 : vector<2x32xf32>
    %195 = vector.extract_strided_slice %188 {offsets = [0, 32], sizes = [2, 32], strides = [1, 1]} : vector<2x128xf32> to vector<2x32xf32>
    %196 = arith.negf %195 : vector<2x32xf32>
    %197 = math.exp %196 : vector<2x32xf32>
    %cst_44 = arith.constant 1.000000e+00 : f32
    %198 = vector.broadcast %cst_44 : f32 to vector<2x32xf32>
    %199 = arith.addf %198, %197 : vector<2x32xf32>
    %200 = arith.divf %198, %199 : vector<2x32xf32>
    %201 = vector.extract_strided_slice %188 {offsets = [0, 64], sizes = [2, 32], strides = [1, 1]} : vector<2x128xf32> to vector<2x32xf32>
    %202 = math.tanh %201 : vector<2x32xf32>
    %203 = vector.extract_strided_slice %188 {offsets = [0, 96], sizes = [2, 32], strides = [1, 1]} : vector<2x128xf32> to vector<2x32xf32>
    %204 = arith.negf %203 : vector<2x32xf32>
    %205 = math.exp %204 : vector<2x32xf32>
    %cst_45 = arith.constant 1.000000e+00 : f32
    %206 = vector.broadcast %cst_45 : f32 to vector<2x32xf32>
    %207 = arith.addf %206, %205 : vector<2x32xf32>
    %208 = arith.divf %206, %207 : vector<2x32xf32>
    %209 = arith.mulf %200, %152 : vector<2x32xf32>
    %210 = arith.mulf %194, %202 : vector<2x32xf32>
    %211 = arith.addf %209, %210 : vector<2x32xf32>
    %212 = math.tanh %211 : vector<2x32xf32>
    %213 = arith.mulf %208, %212 : vector<2x32xf32>
    %cst_46 = arith.constant dense<0.000000e+00> : vector<2x128xf32>
    %214 = tpu.matmul %213, %1, %cst_46 {dimension_numbers = #tpu.dot_dimension_numbers<[1], [0], [0], [1], [0, 0, 1, 1], [], []>} : vector<2x32xf32>, vector<32x128xf32>, vector<2x128xf32> -> vector<2x128xf32>
    %cst_47 = arith.constant dense<0.000000e+00> : vector<2x128xf32>
    %215 = tpu.matmul %183, %2, %cst_47 {dimension_numbers = #tpu.dot_dimension_numbers<[1], [0], [0], [1], [0, 0, 1, 1], [], []>} : vector<2x32xf32>, vector<32x128xf32>, vector<2x128xf32> -> vector<2x128xf32>
    %216 = arith.addf %214, %215 : vector<2x128xf32>
    %217 = arith.addf %216, %5 : vector<2x128xf32>
    %218 = vector.extract_strided_slice %217 {offsets = [0, 0], sizes = [2, 32], strides = [1, 1]} : vector<2x128xf32> to vector<2x32xf32>
    %219 = arith.negf %218 : vector<2x32xf32>
    %220 = math.exp %219 : vector<2x32xf32>
    %cst_48 = arith.constant 1.000000e+00 : f32
    %221 = vector.broadcast %cst_48 : f32 to vector<2x32xf32>
    %222 = arith.addf %221, %220 : vector<2x32xf32>
    %223 = arith.divf %221, %222 : vector<2x32xf32>
    %224 = vector.extract_strided_slice %217 {offsets = [0, 32], sizes = [2, 32], strides = [1, 1]} : vector<2x128xf32> to vector<2x32xf32>
    %225 = arith.negf %224 : vector<2x32xf32>
    %226 = math.exp %225 : vector<2x32xf32>
    %cst_49 = arith.constant 1.000000e+00 : f32
    %227 = vector.broadcast %cst_49 : f32 to vector<2x32xf32>
    %228 = arith.addf %227, %226 : vector<2x32xf32>
    %229 = arith.divf %227, %228 : vector<2x32xf32>
    %230 = vector.extract_strided_slice %217 {offsets = [0, 64], sizes = [2, 32], strides = [1, 1]} : vector<2x128xf32> to vector<2x32xf32>
    %231 = math.tanh %230 : vector<2x32xf32>
    %232 = vector.extract_strided_slice %217 {offsets = [0, 96], sizes = [2, 32], strides = [1, 1]} : vector<2x128xf32> to vector<2x32xf32>
    %233 = arith.negf %232 : vector<2x32xf32>
    %234 = math.exp %233 : vector<2x32xf32>
    %cst_50 = arith.constant 1.000000e+00 : f32
    %235 = vector.broadcast %cst_50 : f32 to vector<2x32xf32>
    %236 = arith.addf %235, %234 : vector<2x32xf32>
    %237 = arith.divf %235, %236 : vector<2x32xf32>
    %238 = arith.mulf %229, %181 : vector<2x32xf32>
    %239 = arith.mulf %223, %231 : vector<2x32xf32>
    %240 = arith.addf %238, %239 : vector<2x32xf32>
    %241 = math.tanh %240 : vector<2x32xf32>
    %242 = arith.mulf %237, %241 : vector<2x32xf32>
    %c4_i32 = arith.constant 4 : i32
    %243 = arith.index_cast %c4_i32 : i32 to index
    %c0_51 = arith.constant 0 : index
    %c0_52 = arith.constant 0 : index
    %244 = vector.load %arg1[%243, %c0_51, %c0_52] : memref<8x2x128xf32, #tpu.memory_space<vmem>>, vector<1x2x128xf32>
    %245 = vector.shape_cast %244 : vector<1x2x128xf32> to vector<2x128xf32>
    %cst_53 = arith.constant dense<0.000000e+00> : vector<2x128xf32>
    %246 = tpu.matmul %213, %0, %cst_53 {dimension_numbers = #tpu.dot_dimension_numbers<[1], [0], [0], [1], [0, 0, 1, 1], [], []>} : vector<2x32xf32>, vector<32x128xf32>, vector<2x128xf32> -> vector<2x128xf32>
    %247 = arith.addf %245, %246 : vector<2x128xf32>
    %248 = vector.extract_strided_slice %247 {offsets = [0, 0], sizes = [2, 32], strides = [1, 1]} : vector<2x128xf32> to vector<2x32xf32>
    %249 = arith.negf %248 : vector<2x32xf32>
    %250 = math.exp %249 : vector<2x32xf32>
    %cst_54 = arith.constant 1.000000e+00 : f32
    %251 = vector.broadcast %cst_54 : f32 to vector<2x32xf32>
    %252 = arith.addf %251, %250 : vector<2x32xf32>
    %253 = arith.divf %251, %252 : vector<2x32xf32>
    %254 = vector.extract_strided_slice %247 {offsets = [0, 32], sizes = [2, 32], strides = [1, 1]} : vector<2x128xf32> to vector<2x32xf32>
    %255 = arith.negf %254 : vector<2x32xf32>
    %256 = math.exp %255 : vector<2x32xf32>
    %cst_55 = arith.constant 1.000000e+00 : f32
    %257 = vector.broadcast %cst_55 : f32 to vector<2x32xf32>
    %258 = arith.addf %257, %256 : vector<2x32xf32>
    %259 = arith.divf %257, %258 : vector<2x32xf32>
    %260 = vector.extract_strided_slice %247 {offsets = [0, 64], sizes = [2, 32], strides = [1, 1]} : vector<2x128xf32> to vector<2x32xf32>
    %261 = math.tanh %260 : vector<2x32xf32>
    %262 = vector.extract_strided_slice %247 {offsets = [0, 96], sizes = [2, 32], strides = [1, 1]} : vector<2x128xf32> to vector<2x32xf32>
    %263 = arith.negf %262 : vector<2x32xf32>
    %264 = math.exp %263 : vector<2x32xf32>
    %cst_56 = arith.constant 1.000000e+00 : f32
    %265 = vector.broadcast %cst_56 : f32 to vector<2x32xf32>
    %266 = arith.addf %265, %264 : vector<2x32xf32>
    %267 = arith.divf %265, %266 : vector<2x32xf32>
    %268 = arith.mulf %259, %211 : vector<2x32xf32>
    %269 = arith.mulf %253, %261 : vector<2x32xf32>
    %270 = arith.addf %268, %269 : vector<2x32xf32>
    %271 = math.tanh %270 : vector<2x32xf32>
    %272 = arith.mulf %267, %271 : vector<2x32xf32>
    %cst_57 = arith.constant dense<0.000000e+00> : vector<2x128xf32>
    %273 = tpu.matmul %272, %1, %cst_57 {dimension_numbers = #tpu.dot_dimension_numbers<[1], [0], [0], [1], [0, 0, 1, 1], [], []>} : vector<2x32xf32>, vector<32x128xf32>, vector<2x128xf32> -> vector<2x128xf32>
    %cst_58 = arith.constant dense<0.000000e+00> : vector<2x128xf32>
    %274 = tpu.matmul %242, %2, %cst_58 {dimension_numbers = #tpu.dot_dimension_numbers<[1], [0], [0], [1], [0, 0, 1, 1], [], []>} : vector<2x32xf32>, vector<32x128xf32>, vector<2x128xf32> -> vector<2x128xf32>
    %275 = arith.addf %273, %274 : vector<2x128xf32>
    %276 = arith.addf %275, %5 : vector<2x128xf32>
    %277 = vector.extract_strided_slice %276 {offsets = [0, 0], sizes = [2, 32], strides = [1, 1]} : vector<2x128xf32> to vector<2x32xf32>
    %278 = arith.negf %277 : vector<2x32xf32>
    %279 = math.exp %278 : vector<2x32xf32>
    %cst_59 = arith.constant 1.000000e+00 : f32
    %280 = vector.broadcast %cst_59 : f32 to vector<2x32xf32>
    %281 = arith.addf %280, %279 : vector<2x32xf32>
    %282 = arith.divf %280, %281 : vector<2x32xf32>
    %283 = vector.extract_strided_slice %276 {offsets = [0, 32], sizes = [2, 32], strides = [1, 1]} : vector<2x128xf32> to vector<2x32xf32>
    %284 = arith.negf %283 : vector<2x32xf32>
    %285 = math.exp %284 : vector<2x32xf32>
    %cst_60 = arith.constant 1.000000e+00 : f32
    %286 = vector.broadcast %cst_60 : f32 to vector<2x32xf32>
    %287 = arith.addf %286, %285 : vector<2x32xf32>
    %288 = arith.divf %286, %287 : vector<2x32xf32>
    %289 = vector.extract_strided_slice %276 {offsets = [0, 64], sizes = [2, 32], strides = [1, 1]} : vector<2x128xf32> to vector<2x32xf32>
    %290 = math.tanh %289 : vector<2x32xf32>
    %291 = vector.extract_strided_slice %276 {offsets = [0, 96], sizes = [2, 32], strides = [1, 1]} : vector<2x128xf32> to vector<2x32xf32>
    %292 = arith.negf %291 : vector<2x32xf32>
    %293 = math.exp %292 : vector<2x32xf32>
    %cst_61 = arith.constant 1.000000e+00 : f32
    %294 = vector.broadcast %cst_61 : f32 to vector<2x32xf32>
    %295 = arith.addf %294, %293 : vector<2x32xf32>
    %296 = arith.divf %294, %295 : vector<2x32xf32>
    %297 = arith.mulf %288, %240 : vector<2x32xf32>
    %298 = arith.mulf %282, %290 : vector<2x32xf32>
    %299 = arith.addf %297, %298 : vector<2x32xf32>
    %300 = math.tanh %299 : vector<2x32xf32>
    %301 = arith.mulf %296, %300 : vector<2x32xf32>
    %c5_i32 = arith.constant 5 : i32
    %302 = arith.index_cast %c5_i32 : i32 to index
    %c0_62 = arith.constant 0 : index
    %c0_63 = arith.constant 0 : index
    %303 = vector.load %arg1[%302, %c0_62, %c0_63] : memref<8x2x128xf32, #tpu.memory_space<vmem>>, vector<1x2x128xf32>
    %304 = vector.shape_cast %303 : vector<1x2x128xf32> to vector<2x128xf32>
    %cst_64 = arith.constant dense<0.000000e+00> : vector<2x128xf32>
    %305 = tpu.matmul %272, %0, %cst_64 {dimension_numbers = #tpu.dot_dimension_numbers<[1], [0], [0], [1], [0, 0, 1, 1], [], []>} : vector<2x32xf32>, vector<32x128xf32>, vector<2x128xf32> -> vector<2x128xf32>
    %306 = arith.addf %304, %305 : vector<2x128xf32>
    %307 = vector.extract_strided_slice %306 {offsets = [0, 0], sizes = [2, 32], strides = [1, 1]} : vector<2x128xf32> to vector<2x32xf32>
    %308 = arith.negf %307 : vector<2x32xf32>
    %309 = math.exp %308 : vector<2x32xf32>
    %cst_65 = arith.constant 1.000000e+00 : f32
    %310 = vector.broadcast %cst_65 : f32 to vector<2x32xf32>
    %311 = arith.addf %310, %309 : vector<2x32xf32>
    %312 = arith.divf %310, %311 : vector<2x32xf32>
    %313 = vector.extract_strided_slice %306 {offsets = [0, 32], sizes = [2, 32], strides = [1, 1]} : vector<2x128xf32> to vector<2x32xf32>
    %314 = arith.negf %313 : vector<2x32xf32>
    %315 = math.exp %314 : vector<2x32xf32>
    %cst_66 = arith.constant 1.000000e+00 : f32
    %316 = vector.broadcast %cst_66 : f32 to vector<2x32xf32>
    %317 = arith.addf %316, %315 : vector<2x32xf32>
    %318 = arith.divf %316, %317 : vector<2x32xf32>
    %319 = vector.extract_strided_slice %306 {offsets = [0, 64], sizes = [2, 32], strides = [1, 1]} : vector<2x128xf32> to vector<2x32xf32>
    %320 = math.tanh %319 : vector<2x32xf32>
    %321 = vector.extract_strided_slice %306 {offsets = [0, 96], sizes = [2, 32], strides = [1, 1]} : vector<2x128xf32> to vector<2x32xf32>
    %322 = arith.negf %321 : vector<2x32xf32>
    %323 = math.exp %322 : vector<2x32xf32>
    %cst_67 = arith.constant 1.000000e+00 : f32
    %324 = vector.broadcast %cst_67 : f32 to vector<2x32xf32>
    %325 = arith.addf %324, %323 : vector<2x32xf32>
    %326 = arith.divf %324, %325 : vector<2x32xf32>
    %327 = arith.mulf %318, %270 : vector<2x32xf32>
    %328 = arith.mulf %312, %320 : vector<2x32xf32>
    %329 = arith.addf %327, %328 : vector<2x32xf32>
    %330 = math.tanh %329 : vector<2x32xf32>
    %331 = arith.mulf %326, %330 : vector<2x32xf32>
    %cst_68 = arith.constant dense<0.000000e+00> : vector<2x128xf32>
    %332 = tpu.matmul %331, %1, %cst_68 {dimension_numbers = #tpu.dot_dimension_numbers<[1], [0], [0], [1], [0, 0, 1, 1], [], []>} : vector<2x32xf32>, vector<32x128xf32>, vector<2x128xf32> -> vector<2x128xf32>
    %cst_69 = arith.constant dense<0.000000e+00> : vector<2x128xf32>
    %333 = tpu.matmul %301, %2, %cst_69 {dimension_numbers = #tpu.dot_dimension_numbers<[1], [0], [0], [1], [0, 0, 1, 1], [], []>} : vector<2x32xf32>, vector<32x128xf32>, vector<2x128xf32> -> vector<2x128xf32>
    %334 = arith.addf %332, %333 : vector<2x128xf32>
    %335 = arith.addf %334, %5 : vector<2x128xf32>
    %336 = vector.extract_strided_slice %335 {offsets = [0, 0], sizes = [2, 32], strides = [1, 1]} : vector<2x128xf32> to vector<2x32xf32>
    %337 = arith.negf %336 : vector<2x32xf32>
    %338 = math.exp %337 : vector<2x32xf32>
    %cst_70 = arith.constant 1.000000e+00 : f32
    %339 = vector.broadcast %cst_70 : f32 to vector<2x32xf32>
    %340 = arith.addf %339, %338 : vector<2x32xf32>
    %341 = arith.divf %339, %340 : vector<2x32xf32>
    %342 = vector.extract_strided_slice %335 {offsets = [0, 32], sizes = [2, 32], strides = [1, 1]} : vector<2x128xf32> to vector<2x32xf32>
    %343 = arith.negf %342 : vector<2x32xf32>
    %344 = math.exp %343 : vector<2x32xf32>
    %cst_71 = arith.constant 1.000000e+00 : f32
    %345 = vector.broadcast %cst_71 : f32 to vector<2x32xf32>
    %346 = arith.addf %345, %344 : vector<2x32xf32>
    %347 = arith.divf %345, %346 : vector<2x32xf32>
    %348 = vector.extract_strided_slice %335 {offsets = [0, 64], sizes = [2, 32], strides = [1, 1]} : vector<2x128xf32> to vector<2x32xf32>
    %349 = math.tanh %348 : vector<2x32xf32>
    %350 = vector.extract_strided_slice %335 {offsets = [0, 96], sizes = [2, 32], strides = [1, 1]} : vector<2x128xf32> to vector<2x32xf32>
    %351 = arith.negf %350 : vector<2x32xf32>
    %352 = math.exp %351 : vector<2x32xf32>
    %cst_72 = arith.constant 1.000000e+00 : f32
    %353 = vector.broadcast %cst_72 : f32 to vector<2x32xf32>
    %354 = arith.addf %353, %352 : vector<2x32xf32>
    %355 = arith.divf %353, %354 : vector<2x32xf32>
    %356 = arith.mulf %347, %299 : vector<2x32xf32>
    %357 = arith.mulf %341, %349 : vector<2x32xf32>
    %358 = arith.addf %356, %357 : vector<2x32xf32>
    %359 = math.tanh %358 : vector<2x32xf32>
    %360 = arith.mulf %355, %359 : vector<2x32xf32>
    %c6_i32 = arith.constant 6 : i32
    %361 = arith.index_cast %c6_i32 : i32 to index
    %c0_73 = arith.constant 0 : index
    %c0_74 = arith.constant 0 : index
    %362 = vector.load %arg1[%361, %c0_73, %c0_74] : memref<8x2x128xf32, #tpu.memory_space<vmem>>, vector<1x2x128xf32>
    %363 = vector.shape_cast %362 : vector<1x2x128xf32> to vector<2x128xf32>
    %cst_75 = arith.constant dense<0.000000e+00> : vector<2x128xf32>
    %364 = tpu.matmul %331, %0, %cst_75 {dimension_numbers = #tpu.dot_dimension_numbers<[1], [0], [0], [1], [0, 0, 1, 1], [], []>} : vector<2x32xf32>, vector<32x128xf32>, vector<2x128xf32> -> vector<2x128xf32>
    %365 = arith.addf %363, %364 : vector<2x128xf32>
    %366 = vector.extract_strided_slice %365 {offsets = [0, 0], sizes = [2, 32], strides = [1, 1]} : vector<2x128xf32> to vector<2x32xf32>
    %367 = arith.negf %366 : vector<2x32xf32>
    %368 = math.exp %367 : vector<2x32xf32>
    %cst_76 = arith.constant 1.000000e+00 : f32
    %369 = vector.broadcast %cst_76 : f32 to vector<2x32xf32>
    %370 = arith.addf %369, %368 : vector<2x32xf32>
    %371 = arith.divf %369, %370 : vector<2x32xf32>
    %372 = vector.extract_strided_slice %365 {offsets = [0, 32], sizes = [2, 32], strides = [1, 1]} : vector<2x128xf32> to vector<2x32xf32>
    %373 = arith.negf %372 : vector<2x32xf32>
    %374 = math.exp %373 : vector<2x32xf32>
    %cst_77 = arith.constant 1.000000e+00 : f32
    %375 = vector.broadcast %cst_77 : f32 to vector<2x32xf32>
    %376 = arith.addf %375, %374 : vector<2x32xf32>
    %377 = arith.divf %375, %376 : vector<2x32xf32>
    %378 = vector.extract_strided_slice %365 {offsets = [0, 64], sizes = [2, 32], strides = [1, 1]} : vector<2x128xf32> to vector<2x32xf32>
    %379 = math.tanh %378 : vector<2x32xf32>
    %380 = vector.extract_strided_slice %365 {offsets = [0, 96], sizes = [2, 32], strides = [1, 1]} : vector<2x128xf32> to vector<2x32xf32>
    %381 = arith.negf %380 : vector<2x32xf32>
    %382 = math.exp %381 : vector<2x32xf32>
    %cst_78 = arith.constant 1.000000e+00 : f32
    %383 = vector.broadcast %cst_78 : f32 to vector<2x32xf32>
    %384 = arith.addf %383, %382 : vector<2x32xf32>
    %385 = arith.divf %383, %384 : vector<2x32xf32>
    %386 = arith.mulf %377, %329 : vector<2x32xf32>
    %387 = arith.mulf %371, %379 : vector<2x32xf32>
    %388 = arith.addf %386, %387 : vector<2x32xf32>
    %389 = math.tanh %388 : vector<2x32xf32>
    %390 = arith.mulf %385, %389 : vector<2x32xf32>
    %cst_79 = arith.constant dense<0.000000e+00> : vector<2x128xf32>
    %391 = tpu.matmul %390, %1, %cst_79 {dimension_numbers = #tpu.dot_dimension_numbers<[1], [0], [0], [1], [0, 0, 1, 1], [], []>} : vector<2x32xf32>, vector<32x128xf32>, vector<2x128xf32> -> vector<2x128xf32>
    %cst_80 = arith.constant dense<0.000000e+00> : vector<2x128xf32>
    %392 = tpu.matmul %360, %2, %cst_80 {dimension_numbers = #tpu.dot_dimension_numbers<[1], [0], [0], [1], [0, 0, 1, 1], [], []>} : vector<2x32xf32>, vector<32x128xf32>, vector<2x128xf32> -> vector<2x128xf32>
    %393 = arith.addf %391, %392 : vector<2x128xf32>
    %394 = arith.addf %393, %5 : vector<2x128xf32>
    %395 = vector.extract_strided_slice %394 {offsets = [0, 0], sizes = [2, 32], strides = [1, 1]} : vector<2x128xf32> to vector<2x32xf32>
    %396 = arith.negf %395 : vector<2x32xf32>
    %397 = math.exp %396 : vector<2x32xf32>
    %cst_81 = arith.constant 1.000000e+00 : f32
    %398 = vector.broadcast %cst_81 : f32 to vector<2x32xf32>
    %399 = arith.addf %398, %397 : vector<2x32xf32>
    %400 = arith.divf %398, %399 : vector<2x32xf32>
    %401 = vector.extract_strided_slice %394 {offsets = [0, 32], sizes = [2, 32], strides = [1, 1]} : vector<2x128xf32> to vector<2x32xf32>
    %402 = arith.negf %401 : vector<2x32xf32>
    %403 = math.exp %402 : vector<2x32xf32>
    %cst_82 = arith.constant 1.000000e+00 : f32
    %404 = vector.broadcast %cst_82 : f32 to vector<2x32xf32>
    %405 = arith.addf %404, %403 : vector<2x32xf32>
    %406 = arith.divf %404, %405 : vector<2x32xf32>
    %407 = vector.extract_strided_slice %394 {offsets = [0, 64], sizes = [2, 32], strides = [1, 1]} : vector<2x128xf32> to vector<2x32xf32>
    %408 = math.tanh %407 : vector<2x32xf32>
    %409 = vector.extract_strided_slice %394 {offsets = [0, 96], sizes = [2, 32], strides = [1, 1]} : vector<2x128xf32> to vector<2x32xf32>
    %410 = arith.negf %409 : vector<2x32xf32>
    %411 = math.exp %410 : vector<2x32xf32>
    %cst_83 = arith.constant 1.000000e+00 : f32
    %412 = vector.broadcast %cst_83 : f32 to vector<2x32xf32>
    %413 = arith.addf %412, %411 : vector<2x32xf32>
    %414 = arith.divf %412, %413 : vector<2x32xf32>
    %415 = arith.mulf %406, %358 : vector<2x32xf32>
    %416 = arith.mulf %400, %408 : vector<2x32xf32>
    %417 = arith.addf %415, %416 : vector<2x32xf32>
    %418 = math.tanh %417 : vector<2x32xf32>
    %419 = arith.mulf %414, %418 : vector<2x32xf32>
    %c7_i32 = arith.constant 7 : i32
    %420 = arith.index_cast %c7_i32 : i32 to index
    %c0_84 = arith.constant 0 : index
    %c0_85 = arith.constant 0 : index
    %421 = vector.load %arg1[%420, %c0_84, %c0_85] : memref<8x2x128xf32, #tpu.memory_space<vmem>>, vector<1x2x128xf32>
    %422 = vector.shape_cast %421 : vector<1x2x128xf32> to vector<2x128xf32>
    %cst_86 = arith.constant dense<0.000000e+00> : vector<2x128xf32>
    %423 = tpu.matmul %390, %0, %cst_86 {dimension_numbers = #tpu.dot_dimension_numbers<[1], [0], [0], [1], [0, 0, 1, 1], [], []>} : vector<2x32xf32>, vector<32x128xf32>, vector<2x128xf32> -> vector<2x128xf32>
    %424 = arith.addf %422, %423 : vector<2x128xf32>
    %425 = vector.extract_strided_slice %424 {offsets = [0, 0], sizes = [2, 32], strides = [1, 1]} : vector<2x128xf32> to vector<2x32xf32>
    %426 = arith.negf %425 : vector<2x32xf32>
    %427 = math.exp %426 : vector<2x32xf32>
    %cst_87 = arith.constant 1.000000e+00 : f32
    %428 = vector.broadcast %cst_87 : f32 to vector<2x32xf32>
    %429 = arith.addf %428, %427 : vector<2x32xf32>
    %430 = arith.divf %428, %429 : vector<2x32xf32>
    %431 = vector.extract_strided_slice %424 {offsets = [0, 32], sizes = [2, 32], strides = [1, 1]} : vector<2x128xf32> to vector<2x32xf32>
    %432 = arith.negf %431 : vector<2x32xf32>
    %433 = math.exp %432 : vector<2x32xf32>
    %cst_88 = arith.constant 1.000000e+00 : f32
    %434 = vector.broadcast %cst_88 : f32 to vector<2x32xf32>
    %435 = arith.addf %434, %433 : vector<2x32xf32>
    %436 = arith.divf %434, %435 : vector<2x32xf32>
    %437 = vector.extract_strided_slice %424 {offsets = [0, 64], sizes = [2, 32], strides = [1, 1]} : vector<2x128xf32> to vector<2x32xf32>
    %438 = math.tanh %437 : vector<2x32xf32>
    %439 = vector.extract_strided_slice %424 {offsets = [0, 96], sizes = [2, 32], strides = [1, 1]} : vector<2x128xf32> to vector<2x32xf32>
    %440 = arith.negf %439 : vector<2x32xf32>
    %441 = math.exp %440 : vector<2x32xf32>
    %cst_89 = arith.constant 1.000000e+00 : f32
    %442 = vector.broadcast %cst_89 : f32 to vector<2x32xf32>
    %443 = arith.addf %442, %441 : vector<2x32xf32>
    %444 = arith.divf %442, %443 : vector<2x32xf32>
    %445 = arith.mulf %436, %388 : vector<2x32xf32>
    %446 = arith.mulf %430, %438 : vector<2x32xf32>
    %447 = arith.addf %445, %446 : vector<2x32xf32>
    %448 = math.tanh %447 : vector<2x32xf32>
    %449 = arith.mulf %444, %448 : vector<2x32xf32>
    %cst_90 = arith.constant dense<0.000000e+00> : vector<2x128xf32>
    %450 = tpu.matmul %449, %1, %cst_90 {dimension_numbers = #tpu.dot_dimension_numbers<[1], [0], [0], [1], [0, 0, 1, 1], [], []>} : vector<2x32xf32>, vector<32x128xf32>, vector<2x128xf32> -> vector<2x128xf32>
    %cst_91 = arith.constant dense<0.000000e+00> : vector<2x128xf32>
    %451 = tpu.matmul %419, %2, %cst_91 {dimension_numbers = #tpu.dot_dimension_numbers<[1], [0], [0], [1], [0, 0, 1, 1], [], []>} : vector<2x32xf32>, vector<32x128xf32>, vector<2x128xf32> -> vector<2x128xf32>
    %452 = arith.addf %450, %451 : vector<2x128xf32>
    %453 = arith.addf %452, %5 : vector<2x128xf32>
    %454 = vector.extract_strided_slice %453 {offsets = [0, 0], sizes = [2, 32], strides = [1, 1]} : vector<2x128xf32> to vector<2x32xf32>
    %455 = arith.negf %454 : vector<2x32xf32>
    %456 = math.exp %455 : vector<2x32xf32>
    %cst_92 = arith.constant 1.000000e+00 : f32
    %457 = vector.broadcast %cst_92 : f32 to vector<2x32xf32>
    %458 = arith.addf %457, %456 : vector<2x32xf32>
    %459 = arith.divf %457, %458 : vector<2x32xf32>
    %460 = vector.extract_strided_slice %453 {offsets = [0, 32], sizes = [2, 32], strides = [1, 1]} : vector<2x128xf32> to vector<2x32xf32>
    %461 = arith.negf %460 : vector<2x32xf32>
    %462 = math.exp %461 : vector<2x32xf32>
    %cst_93 = arith.constant 1.000000e+00 : f32
    %463 = vector.broadcast %cst_93 : f32 to vector<2x32xf32>
    %464 = arith.addf %463, %462 : vector<2x32xf32>
    %465 = arith.divf %463, %464 : vector<2x32xf32>
    %466 = vector.extract_strided_slice %453 {offsets = [0, 64], sizes = [2, 32], strides = [1, 1]} : vector<2x128xf32> to vector<2x32xf32>
    %467 = math.tanh %466 : vector<2x32xf32>
    %468 = vector.extract_strided_slice %453 {offsets = [0, 96], sizes = [2, 32], strides = [1, 1]} : vector<2x128xf32> to vector<2x32xf32>
    %469 = arith.negf %468 : vector<2x32xf32>
    %470 = math.exp %469 : vector<2x32xf32>
    %cst_94 = arith.constant 1.000000e+00 : f32
    %471 = vector.broadcast %cst_94 : f32 to vector<2x32xf32>
    %472 = arith.addf %471, %470 : vector<2x32xf32>
    %473 = arith.divf %471, %472 : vector<2x32xf32>
    %474 = arith.mulf %465, %417 : vector<2x32xf32>
    %475 = arith.mulf %459, %467 : vector<2x32xf32>
    %476 = arith.addf %474, %475 : vector<2x32xf32>
    %477 = math.tanh %476 : vector<2x32xf32>
    %478 = arith.mulf %473, %477 : vector<2x32xf32>
    %c8_i32 = arith.constant 8 : i32
    %c0_95 = arith.constant 0 : index
    %c0_96 = arith.constant 0 : index
    %479 = vector.load %arg6[%c0_95, %c0_96] : memref<32x8xf32, #tpu.memory_space<vmem>>, vector<32x8xf32>
    %cst_97 = arith.constant dense<0.000000e+00> : vector<2x8xf32>
    %480 = tpu.matmul %478, %479, %cst_97 {dimension_numbers = #tpu.dot_dimension_numbers<[1], [0], [0], [1], [0, 0, 1, 1], [], []>} : vector<2x32xf32>, vector<32x8xf32>, vector<2x8xf32> -> vector<2x8xf32>
    %c0_98 = arith.constant 0 : index
    %c0_99 = arith.constant 0 : index
    %481 = vector.load %arg7[%c0_98, %c0_99] : memref<1x8xf32, #tpu.memory_space<vmem>>, vector<1x8xf32>
    %482 = vector.broadcast %481 : vector<1x8xf32> to vector<2x8xf32>
    %483 = arith.addf %480, %482 : vector<2x8xf32>
    %c0_100 = arith.constant 0 : index
    %c0_101 = arith.constant 0 : index
    %484 = vector.load %arg8[%c0_100, %c0_101] : memref<2x8xf32, #tpu.memory_space<vmem>>, vector<2x8xf32>
    tpu.vector_store %arg8[%c0_100, %c0_101], %483 {strides = array<i32>} : memref<2x8xf32, #tpu.memory_space<vmem>>, vector<2x8xf32>,
    return
  }
  func.func @transform_0(%arg0: i32) -> (i32, i32, i32) {
    %c0_i32 = arith.constant 0 : i32
    %c0_i32_0 = arith.constant 0 : i32
    %c0_i32_1 = arith.constant 0 : i32
    %c0_i32_2 = arith.constant 0 : i32
    return %c0_i32, %c0_i32_0, %c0_i32_1 : i32, i32, i32
  }
  func.func @transform_1(%arg0: i32) -> (i32, i32) {
    %c0_i32 = arith.constant 0 : i32
    %c0_i32_0 = arith.constant 0 : i32
    %c0_i32_1 = arith.constant 0 : i32
    return %c0_i32, %c0_i32_0 : i32, i32
  }
  func.func @transform_2(%arg0: i32) -> (i32, i32) {
    %c0_i32 = arith.constant 0 : i32
    %c0_i32_0 = arith.constant 0 : i32
    %c0_i32_1 = arith.constant 0 : i32
    return %c0_i32, %c0_i32_0 : i32, i32
  }
  func.func @transform_3(%arg0: i32) -> (i32, i32) {
    %c0_i32 = arith.constant 0 : i32
    %c0_i32_0 = arith.constant 0 : i32
    %c0_i32_1 = arith.constant 0 : i32
    return %c0_i32, %c0_i32_0 : i32, i32
  }
  func.func @transform_4(%arg0: i32) -> (i32, i32) {
    %c0_i32 = arith.constant 0 : i32
    %c0_i32_0 = arith.constant 0 : i32
    %c0_i32_1 = arith.constant 0 : i32
    return %c0_i32, %c0_i32_0 : i32, i32
  }
  func.func @transform_5(%arg0: i32) -> (i32, i32) {
    %c0_i32 = arith.constant 0 : i32
    %c0_i32_0 = arith.constant 0 : i32
    %c0_i32_1 = arith.constant 0 : i32
    return %c0_i32, %c0_i32_0 : i32, i32
  }
  func.func @transform_6(%arg0: i32) -> (i32, i32) {
    %c0_i32 = arith.constant 0 : i32
    %c0_i32_0 = arith.constant 0 : i32
    %c0_i32_1 = arith.constant 0 : i32
    return %c0_i32, %c0_i32_0 : i32, i32
  }
  func.func @transform_7(%arg0: i32) -> (i32, i32) {
    %c0_i32 = arith.constant 0 : i32
    %c0_i32_0 = arith.constant 0 : i32
    %c0_i32_1 = arith.constant 0 : i32
    return %c0_i32, %c0_i32_0 : i32, i32
  }
}

</mosaic_0001>

<llo_original>
// kernel: lstm_model_forward.1
$region0: #{lstm_model_forward.1}
  #allocation0 [shape = 'u32[]', space=smem, size = 0x4, offset = 0x4, fixed_abs, tag = 'smem constant byte address 0x4 - core index']
  #allocation1 [shape = 'u32[144,128]{1,0:T(1,128)}', space=vmem, size = 0x12000, scoped, tag = 'internal scratch']
  %s0 = inlined_call_operand.vmem [shape: f32[8,2,128], index: 0, kind: input, shape index: {}]
  %s1 = inlined_call_operand.vmem [shape: f32[32,128], index: 1, kind: input, shape index: {}]
  %s2 = inlined_call_operand.vmem [shape: f32[32,128], index: 2, kind: input, shape index: {}]
  %s3 = inlined_call_operand.vmem [shape: f32[32,128], index: 3, kind: input, shape index: {}]
  %s4 = inlined_call_operand.vmem [shape: f32[1,128], index: 4, kind: input, shape index: {}]
  %s5 = inlined_call_operand.vmem [shape: f32[32,8], index: 5, kind: input, shape index: {}]
  %s6 = inlined_call_operand.vmem [shape: f32[1,8], index: 6, kind: input, shape index: {}]
  %s7 = inlined_call_operand.hbm [shape: f32[2,8], index: 7, kind: output, shape index: {}]
  %s8 = sld [smem:[#allocation0]]
  $region38: #{lstm_model_forward.1} parent=0
    _
  %s10 = ssub.s32 1, %s8
  %s11 = scalar_select 0, %s10, %s8
  $region1: #{lstm_model_forward.1} parent=0
    #allocation2 [shape = 'u8[1024]{0}', space=vmem, size = 0x400, scoped, tag = 'output window, operand 0, single buffered']
    #allocation3 [shape = 's32[1]{0}', space=sflag, size = 0x4, scoped, tag = 'scoped memory for lstm_model_forward.1']
    %12 = vsyncpa [#allocation3], 0
    // Predicated region
    $region2: #{lstm_model_forward.1} parent=1 // pred_check
      _
    $region3: #{lstm_model_forward.1} parent=1 // pred_check_branch
      %14 = sbr.rel (0) target = $region5
    $region4: #{lstm_model_forward.1} parent=1 // pred_region
      _
    $region5: #{lstm_model_forward.1} parent=1 // pred_fallthru
      _
    // Predicated region
    $region6: #{lstm_model_forward.1} parent=1 // pred_check
      _
    $region7: #{lstm_model_forward.1} parent=1 // pred_check_branch
      %16 = sbr.rel (0) target = $region9
    $region8: #{lstm_model_forward.1} parent=1 // pred_region
      _
    $region9: #{lstm_model_forward.1} parent=1 // pred_fallthru
      _
    // Predicated region
    $region10: #{lstm_model_forward.1} parent=1 // pred_check
      _
    $region11: #{lstm_model_forward.1} parent=1 // pred_check_branch
      %18 = sbr.rel (0) target = $region13
    $region12: #{lstm_model_forward.1} parent=1 // pred_region
      _
    $region13: #{lstm_model_forward.1} parent=1 // pred_fallthru
      _
    // Predicated region
    $region14: #{lstm_model_forward.1} parent=1 // pred_check
      _
    $region15: #{lstm_model_forward.1} parent=1 // pred_check_branch
      %20 = sbr.rel (0) target = $region17
    $region16: #{lstm_model_forward.1} parent=1 // pred_region
      _
    $region17: #{lstm_model_forward.1} parent=1 // pred_fallthru
      _
    // Predicated region
    $region18: #{lstm_model_forward.1} parent=1 // pred_check
      _
    $region19: #{lstm_model_forward.1} parent=1 // pred_check_branch
      %22 = sbr.rel (0) target = $region21
    $region20: #{lstm_model_forward.1} parent=1 // pred_region
      _
    $region21: #{lstm_model_forward.1} parent=1 // pred_fallthru
      _
    // Predicated region
    $region22: #{lstm_model_forward.1} parent=1 // pred_check
      _
    $region23: #{lstm_model_forward.1} parent=1 // pred_check_branch
      %24 = sbr.rel (0) target = $region25
    $region24: #{lstm_model_forward.1} parent=1 // pred_region
      _
    $region25: #{lstm_model_forward.1} parent=1 // pred_fallthru
      _
    // Predicated region
    $region26: #{lstm_model_forward.1} parent=1 // pred_check
      _
    $region27: #{lstm_model_forward.1} parent=1 // pred_check_branch
      %26 = sbr.rel (0) target = $region29
    $region28: #{lstm_model_forward.1} parent=1 // pred_region
      _
    $region29: #{lstm_model_forward.1} parent=1 // pred_fallthru
      _
    %v27 = vld [vmem:[%s1] sm:$0xff]
    %v28 = vld [vmem:[%s1 + $0x8] sm:$0xff]
    %v29 = vld [vmem:[%s1 + $0x10] sm:$0xff]
    %v30 = vld [vmem:[%s1 + $0x18] sm:$0xff]
    %v31 = vld [vmem:[%s2] sm:$0xff]
    %v32 = vld [vmem:[%s2 + $0x8] sm:$0xff]
    %v33 = vld [vmem:[%s2 + $0x10] sm:$0xff]
    %v34 = vld [vmem:[%s2 + $0x18] sm:$0xff]
    %v35 = vld [vmem:[%s3] sm:$0xff]
    %v36 = vld [vmem:[%s3 + $0x8] sm:$0xff]
    %v37 = vld [vmem:[%s3 + $0x10] sm:$0xff]
    %v38 = vld [vmem:[%s3 + $0x18] sm:$0xff]
    %v39 = vld [vmem:[%s4] sm:$0x1]
    %v41 = vlaneseq
    %v42 = vshrl.u32 %v41, 7
    %v43 = vsub.s32 0, %v42
    %v44 = vrot.slane %v39, %v43
    %v46 = vld [vmem:[%s0] sm:$0x3]
    %vm47 = vcmask 261120
    %v49 = vsel %vm47, 0.0, 0
    %51 = vmatprep.subr.mxu0 0.0
    %52 = vmatpush1.msra.mxu0 0.0
    %53 = vmatprep.subr.mxu0 0.0
    %54 = vmatpush1.msra.mxu0 0.0
    %55 = vmatprep.subr.mxu0 0.0
    %56 = vmatpush1.msra.mxu0 0.0
    %57 = vmatprep.subr.mxu0 0.0
    %58 = vmatpush1.msra.mxu0 0.0
    %59 = vmatprep.subr.mxu0 0.0
    %60 = vmatpush1.msra.mxu0 0.0
    %61 = vmatprep.subr.mxu0 0.0
    %62 = vmatpush1.msra.mxu0 0.0
    %63 = vmatprep.subr.mxu0 0.0
    %64 = vmatpush1.msra.mxu0 0.0
    %65 = vmatprep.subr.mxu0 0.0
    %66 = vmatpush1.msra.mxu0 0.0
    %67 = vmatprep.subr.mxu0 0.0
    %68 = vmatpush1.msra.mxu0 0.0
    %69 = vmatprep.subr.mxu0 0.0
    %70 = vmatpush1.msra.mxu0 0.0
    %71 = vmatprep.subr.mxu0 0.0
    %72 = vmatpush1.msra.mxu0 0.0
    %73 = vmatprep.subr.mxu0 0.0
    %74 = vmatpush1.msra.mxu0 0.0
    %75 = vmatprep.subr.mxu0 0.0
    %76 = vmatpush1.msra.mxu0 %v30
    %77 = vmatprep.subr.mxu0 0.0
    %78 = vmatpush1.msra.mxu0 %v29
    %79 = vmatprep.subr.mxu0 0.0
    %80 = vmatpush1.msra.mxu0 %v28
    %81 = vmatprep.subr.mxu0 0.0
    %82 = vmatpush1.msra.mxu0 %v27
    %83 = vmatprep.subr.mxu0 0.0
    %84 = vmatpush2.msra.mxu0 0.0
    %85 = vmatprep.subr.mxu0 0.0
    %86 = vmatpush2.msra.mxu0 0.0
    %87 = vmatprep.subr.mxu0 0.0
    %88 = vmatpush2.msra.mxu0 0.0
    %89 = vmatprep.subr.mxu0 0.0
    %90 = vmatpush2.msra.mxu0 0.0
    %91 = vmatprep.subr.mxu0 0.0
    %92 = vmatpush2.msra.mxu0 0.0
    %93 = vmatprep.subr.mxu0 0.0
    %94 = vmatpush2.msra.mxu0 0.0
    %95 = vmatprep.subr.mxu0 0.0
    %96 = vmatpush2.msra.mxu0 0.0
    %97 = vmatprep.subr.mxu0 0.0
    %98 = vmatpush2.msra.mxu0 0.0
    %99 = vmatprep.subr.mxu0 0.0
    %100 = vmatpush2.msra.mxu0 0.0
    %101 = vmatprep.subr.mxu0 0.0
    %102 = vmatpush2.msra.mxu0 0.0
    %103 = vmatprep.subr.mxu0 0.0
    %104 = vmatpush2.msra.mxu0 0.0
    %105 = vmatprep.subr.mxu0 0.0
    %106 = vmatpush2.msra.mxu0 0.0
    %107 = vmatprep.subr.mxu0 0.0
    %108 = vmatpush2.msra.mxu0 0.0
    %109 = vmatprep.subr.mxu0 0.0
    %110 = vmatpush2.msra.mxu0 0.0
    %111 = vmatprep.subr.mxu0 0.0
    %112 = vmatpush2.msra.mxu0 0.0
    %113 = vmatprep.subr.mxu0 0.0
    %114 = vmatpush2.msra.mxu0 0.0
    %115 = vmatprep.mubr.f32.mxu0 0.0
    %116 = vmatmul.mubr.f32.gmra.mxu0 %v49
    %v117 = vpop.f32.mrf.mxu0
    %v118 = vadd.f32 0.0, %v117
    %v119 = vpop.f32.mrf.mxu0
    %120 = vdwg.mxu0
    %v121 = vadd.f32 %v46, %v118
    %v122 = vxor.u32 %v121, 2147483648
    %v123 = vmul.f32 %v122, 1.442695
    %v124 = vpow.pop %v123
    %v125 = vadd.f32 %v124, 1.0
    %v126 = vrcp.pop %v125
    %v127 = vmul.f32 1.0, %v126
    %v128 = vtanh.pop %v121
    %v129 = vmul.f32 %v127, 0.0
    %131 = vrot.lane.b32.xlu0 %v128, 64
    %v132 = vpop.permute.xlu0 %131
    %v134 = vmul.f32 %v127, %v132
    %136 = vrot.lane.b32.xlu0 %v134, 32
    %v137 = vpop.permute.xlu0 %136
    %v139 = vadd.f32 %v129, %v137
    %v140 = vtanh.pop %v139
    %142 = vrot.lane.b32.xlu0 %v140, 64
    %v143 = vpop.permute.xlu0 %142
    %v145 = vmul.f32 %v127, %v143
    %146 = vmatprep.subr.mxu0 0.0
    %147 = vmatpush1.msra.mxu0 0.0
    %148 = vmatprep.subr.mxu0 0.0
    %149 = vmatpush1.msra.mxu0 0.0
    %150 = vmatprep.subr.mxu0 0.0
    %151 = vmatpush1.msra.mxu0 0.0
    %152 = vmatprep.subr.mxu0 0.0
    %153 = vmatpush1.msra.mxu0 0.0
    %154 = vmatprep.subr.mxu0 0.0
    %155 = vmatpush1.msra.mxu0 0.0
    %156 = vmatprep.subr.mxu0 0.0
    %157 = vmatpush1.msra.mxu0 0.0
    %158 = vmatprep.subr.mxu0 0.0
    %159 = vmatpush1.msra.mxu0 0.0
    %160 = vmatprep.subr.mxu0 0.0
    %161 = vmatpush1.msra.mxu0 0.0
    %162 = vmatprep.subr.mxu0 0.0
    %163 = vmatpush1.msra.mxu0 0.0
    %164 = vmatprep.subr.mxu0 0.0
    %165 = vmatpush1.msra.mxu0 0.0
    %166 = vmatprep.subr.mxu0 0.0
    %167 = vmatpush1.msra.mxu0 0.0
    %168 = vmatprep.subr.mxu0 0.0
    %169 = vmatpush1.msra.mxu0 0.0
    %170 = vmatprep.subr.mxu0 0.0
    %171 = vmatpush1.msra.mxu0 %v38
    %172 = vmatprep.subr.mxu0 0.0
    %173 = vmatpush1.msra.mxu0 %v37
    %174 = vmatprep.subr.mxu0 0.0
    %175 = vmatpush1.msra.mxu0 %v36
    %176 = vmatprep.subr.mxu0 0.0
    %177 = vmatpush1.msra.mxu0 %v35
    %178 = vmatprep.subr.mxu0 0.0
    %179 = vmatpush2.msra.mxu0 0.0
    %180 = vmatprep.subr.mxu0 0.0
    %181 = vmatpush2.msra.mxu0 0.0
    %182 = vmatprep.subr.mxu0 0.0
    %183 = vmatpush2.msra.mxu0 0.0
    %184 = vmatprep.subr.mxu0 0.0
    %185 = vmatpush2.msra.mxu0 0.0
    %186 = vmatprep.subr.mxu0 0.0
    %187 = vmatpush2.msra.mxu0 0.0
    %188 = vmatprep.subr.mxu0 0.0
    %189 = vmatpush2.msra.mxu0 0.0
    %190 = vmatprep.subr.mxu0 0.0
    %191 = vmatpush2.msra.mxu0 0.0
    %192 = vmatprep.subr.mxu0 0.0
    %193 = vmatpush2.msra.mxu0 0.0
    %194 = vmatprep.subr.mxu0 0.0
    %195 = vmatpush2.msra.mxu0 0.0
    %196 = vmatprep.subr.mxu0 0.0
    %197 = vmatpush2.msra.mxu0 0.0
    %198 = vmatprep.subr.mxu0 0.0
    %199 = vmatpush2.msra.mxu0 0.0
    %200 = vmatprep.subr.mxu0 0.0
    %201 = vmatpush2.msra.mxu0 0.0
    %202 = vmatprep.subr.mxu0 0.0
    %203 = vmatpush2.msra.mxu0 0.0
    %204 = vmatprep.subr.mxu0 0.0
    %205 = vmatpush2.msra.mxu0 0.0
    %206 = vmatprep.subr.mxu0 0.0
    %207 = vmatpush2.msra.mxu0 0.0
    %208 = vmatprep.subr.mxu0 0.0
    %209 = vmatpush2.msra.mxu0 0.0
    %210 = vmatprep.mubr.f32.mxu0 0.0
    %211 = vmatmul.mubr.f32.gmra.mxu0 %v49
    %v212 = vpop.f32.mrf.mxu0
    %v213 = vadd.f32 0.0, %v212
    %v214 = vpop.f32.mrf.mxu0
    %215 = vdwg.mxu0
    %217 = vrot.lane.b32.xlu0 %v145, 32
    %v218 = vpop.permute.xlu0 %217
    %v219 = vsel %vm47, %v218, 0
    %221 = vmatprep.subr.mxu0 0.0
    %222 = vmatpush1.msra.mxu0 0.0
    %223 = vmatprep.subr.mxu0 0.0
    %224 = vmatpush1.msra.mxu0 0.0
    %225 = vmatprep.subr.mxu0 0.0
    %226 = vmatpush1.msra.mxu0 0.0
    %227 = vmatprep.subr.mxu0 0.0
    %228 = vmatpush1.msra.mxu0 0.0
    %229 = vmatprep.subr.mxu0 0.0
    %230 = vmatpush1.msra.mxu0 0.0
    %231 = vmatprep.subr.mxu0 0.0
    %232 = vmatpush1.msra.mxu0 0.0
    %233 = vmatprep.subr.mxu0 0.0
    %234 = vmatpush1.msra.mxu0 0.0
    %235 = vmatprep.subr.mxu0 0.0
    %236 = vmatpush1.msra.mxu0 0.0
    %237 = vmatprep.subr.mxu0 0.0
    %238 = vmatpush1.msra.mxu0 0.0
    %239 = vmatprep.subr.mxu0 0.0
    %240 = vmatpush1.msra.mxu0 0.0
    %241 = vmatprep.subr.mxu0 0.0
    %242 = vmatpush1.msra.mxu0 0.0
    %243 = vmatprep.subr.mxu0 0.0
    %244 = vmatpush1.msra.mxu0 0.0
    %245 = vmatprep.subr.mxu0 0.0
    %246 = vmatpush1.msra.mxu0 %v34
    %247 = vmatprep.subr.mxu0 0.0
    %248 = vmatpush1.msra.mxu0 %v33
    %249 = vmatprep.subr.mxu0 0.0
    %250 = vmatpush1.msra.mxu0 %v32
    %251 = vmatprep.subr.mxu0 0.0
    %252 = vmatpush1.msra.mxu0 %v31
    %253 = vmatprep.subr.mxu0 0.0
    %254 = vmatpush2.msra.mxu0 0.0
    %255 = vmatprep.subr.mxu0 0.0
    %256 = vmatpush2.msra.mxu0 0.0
    %257 = vmatprep.subr.mxu0 0.0
    %258 = vmatpush2.msra.mxu0 0.0
    %259 = vmatprep.subr.mxu0 0.0
    %260 = vmatpush2.msra.mxu0 0.0
    %261 = vmatprep.subr.mxu0 0.0
    %262 = vmatpush2.msra.mxu0 0.0
    %263 = vmatprep.subr.mxu0 0.0
    %264 = vmatpush2.msra.mxu0 0.0
    %265 = vmatprep.subr.mxu0 0.0
    %266 = vmatpush2.msra.mxu0 0.0
    %267 = vmatprep.subr.mxu0 0.0
    %268 = vmatpush2.msra.mxu0 0.0
    %269 = vmatprep.subr.mxu0 0.0
    %270 = vmatpush2.msra.mxu0 0.0
    %271 = vmatprep.subr.mxu0 0.0
    %272 = vmatpush2.msra.mxu0 0.0
    %273 = vmatprep.subr.mxu0 0.0
    %274 = vmatpush2.msra.mxu0 0.0
    %275 = vmatprep.subr.mxu0 0.0
    %276 = vmatpush2.msra.mxu0 0.0
    %277 = vmatprep.subr.mxu0 0.0
    %278 = vmatpush2.msra.mxu0 0.0
    %279 = vmatprep.subr.mxu0 0.0
    %280 = vmatpush2.msra.mxu0 0.0
    %281 = vmatprep.subr.mxu0 0.0
    %282 = vmatpush2.msra.mxu0 0.0
    %283 = vmatprep.subr.mxu0 0.0
    %284 = vmatpush2.msra.mxu0 0.0
    %285 = vmatprep.mubr.f32.mxu0 0.0
    %286 = vmatmul.mubr.f32.gmra.mxu0 %v219
    %v287 = vpop.f32.mrf.mxu0
    %v288 = vadd.f32 %v213, %v287
    %v289 = vpop.f32.mrf.mxu0
    %290 = vdwg.mxu0
    %v291 = vadd.f32 %v288, %v44
    %v292 = vxor.u32 %v291, 2147483648
    %v293 = vmul.f32 %v292, 1.442695
    %v294 = vpow.pop %v293
    %v295 = vadd.f32 %v294, 1.0
    %v296 = vrcp.pop %v295
    %v297 = vmul.f32 1.0, %v296
    %v298 = vtanh.pop %v291
    %v299 = vmul.f32 %v297, 0.0
    %301 = vrot.lane.b32.xlu0 %v298, 64
    %v302 = vpop.permute.xlu0 %301
    %v304 = vmul.f32 %v297, %v302
    %306 = vrot.lane.b32.xlu0 %v304, 32
    %v307 = vpop.permute.xlu0 %306
    %v309 = vadd.f32 %v299, %v307
    %v310 = vtanh.pop %v309
    %312 = vrot.lane.b32.xlu0 %v310, 64
    %v313 = vpop.permute.xlu0 %312
    %v315 = vmul.f32 %v297, %v313
    %s316 = scalar_lea.vmem %s0, 2
    %v317 = vld [vmem:[%s316] sm:$0x3]
    %318 = vmatprep.subr.mxu0 0.0
    %319 = vmatpush1.msra.mxu0 0.0
    %320 = vmatprep.subr.mxu0 0.0
    %321 = vmatpush1.msra.mxu0 0.0
    %322 = vmatprep.subr.mxu0 0.0
    %323 = vmatpush1.msra.mxu0 0.0
    %324 = vmatprep.subr.mxu0 0.0
    %325 = vmatpush1.msra.mxu0 0.0
    %326 = vmatprep.subr.mxu0 0.0
    %327 = vmatpush1.msra.mxu0 0.0
    %328 = vmatprep.subr.mxu0 0.0
    %329 = vmatpush1.msra.mxu0 0.0
    %330 = vmatprep.subr.mxu0 0.0
    %331 = vmatpush1.msra.mxu0 0.0
    %332 = vmatprep.subr.mxu0 0.0
    %333 = vmatpush1.msra.mxu0 0.0
    %334 = vmatprep.subr.mxu0 0.0
    %335 = vmatpush1.msra.mxu0 0.0
    %336 = vmatprep.subr.mxu0 0.0
    %337 = vmatpush1.msra.mxu0 0.0
    %338 = vmatprep.subr.mxu0 0.0
    %339 = vmatpush1.msra.mxu0 0.0
    %340 = vmatprep.subr.mxu0 0.0
    %341 = vmatpush1.msra.mxu0 0.0
    %342 = vmatprep.subr.mxu0 0.0
    %343 = vmatpush1.msra.mxu0 %v30
    %344 = vmatprep.subr.mxu0 0.0
    %345 = vmatpush1.msra.mxu0 %v29
    %346 = vmatprep.subr.mxu0 0.0
    %347 = vmatpush1.msra.mxu0 %v28
    %348 = vmatprep.subr.mxu0 0.0
    %349 = vmatpush1.msra.mxu0 %v27
    %350 = vmatprep.subr.mxu0 0.0
    %351 = vmatpush2.msra.mxu0 0.0
    %352 = vmatprep.subr.mxu0 0.0
    %353 = vmatpush2.msra.mxu0 0.0
    %354 = vmatprep.subr.mxu0 0.0
    %355 = vmatpush2.msra.mxu0 0.0
    %356 = vmatprep.subr.mxu0 0.0
    %357 = vmatpush2.msra.mxu0 0.0
    %358 = vmatprep.subr.mxu0 0.0
    %359 = vmatpush2.msra.mxu0 0.0
    %360 = vmatprep.subr.mxu0 0.0
    %361 = vmatpush2.msra.mxu0 0.0
    %362 = vmatprep.subr.mxu0 0.0
    %363 = vmatpush2.msra.mxu0 0.0
    %364 = vmatprep.subr.mxu0 0.0
    %365 = vmatpush2.msra.mxu0 0.0
    %366 = vmatprep.subr.mxu0 0.0
    %367 = vmatpush2.msra.mxu0 0.0
    %368 = vmatprep.subr.mxu0 0.0
    %369 = vmatpush2.msra.mxu0 0.0
    %370 = vmatprep.subr.mxu0 0.0
    %371 = vmatpush2.msra.mxu0 0.0
    %372 = vmatprep.subr.mxu0 0.0
    %373 = vmatpush2.msra.mxu0 0.0
    %374 = vmatprep.subr.mxu0 0.0
    %375 = vmatpush2.msra.mxu0 0.0
    %376 = vmatprep.subr.mxu0 0.0
    %377 = vmatpush2.msra.mxu0 0.0
    %378 = vmatprep.subr.mxu0 0.0
    %379 = vmatpush2.msra.mxu0 0.0
    %380 = vmatprep.subr.mxu0 0.0
    %381 = vmatpush2.msra.mxu0 0.0
    %382 = vmatprep.mubr.f32.mxu0 0.0
    %383 = vmatmul.mubr.f32.gmra.mxu0 %v219
    %v384 = vpop.f32.mrf.mxu0
    %v385 = vadd.f32 0.0, %v384
    %v386 = vpop.f32.mrf.mxu0
    %387 = vdwg.mxu0
    %v388 = vadd.f32 %v317, %v385
    %v389 = vxor.u32 %v388, 2147483648
    %v390 = vmul.f32 %v389, 1.442695
    %v391 = vpow.pop %v390
    %v392 = vadd.f32 %v391, 1.0
    %v393 = vrcp.pop %v392
    %v394 = vmul.f32 1.0, %v393
    %v395 = vtanh.pop %v388
    %v396 = vmul.f32 %v394, %v139
    %398 = vrot.lane.b32.xlu0 %v395, 64
    %v399 = vpop.permute.xlu0 %398
    %v401 = vmul.f32 %v394, %v399
    %403 = vrot.lane.b32.xlu0 %v401, 32
    %v404 = vpop.permute.xlu0 %403
    %v406 = vadd.f32 %v396, %v404
    %v407 = vtanh.pop %v406
    %409 = vrot.lane.b32.xlu0 %v407, 64
    %v410 = vpop.permute.xlu0 %409
    %v412 = vmul.f32 %v394, %v410
    %414 = vrot.lane.b32.xlu0 %v315, 32
    %v415 = vpop.permute.xlu0 %414
    %v416 = vsel %vm47, %v415, 0
    %418 = vmatprep.subr.mxu0 0.0
    %419 = vmatpush1.msra.mxu0 0.0
    %420 = vmatprep.subr.mxu0 0.0
    %421 = vmatpush1.msra.mxu0 0.0
    %422 = vmatprep.subr.mxu0 0.0
    %423 = vmatpush1.msra.mxu0 0.0
    %424 = vmatprep.subr.mxu0 0.0
    %425 = vmatpush1.msra.mxu0 0.0
    %426 = vmatprep.subr.mxu0 0.0
    %427 = vmatpush1.msra.mxu0 0.0
    %428 = vmatprep.subr.mxu0 0.0
    %429 = vmatpush1.msra.mxu0 0.0
    %430 = vmatprep.subr.mxu0 0.0
    %431 = vmatpush1.msra.mxu0 0.0
    %432 = vmatprep.subr.mxu0 0.0
    %433 = vmatpush1.msra.mxu0 0.0
    %434 = vmatprep.subr.mxu0 0.0
    %435 = vmatpush1.msra.mxu0 0.0
    %436 = vmatprep.subr.mxu0 0.0
    %437 = vmatpush1.msra.mxu0 0.0
    %438 = vmatprep.subr.mxu0 0.0
    %439 = vmatpush1.msra.mxu0 0.0
    %440 = vmatprep.subr.mxu0 0.0
    %441 = vmatpush1.msra.mxu0 0.0
    %442 = vmatprep.subr.mxu0 0.0
    %443 = vmatpush1.msra.mxu0 %v38
    %444 = vmatprep.subr.mxu0 0.0
    %445 = vmatpush1.msra.mxu0 %v37
    %446 = vmatprep.subr.mxu0 0.0
    %447 = vmatpush1.msra.mxu0 %v36
    %448 = vmatprep.subr.mxu0 0.0
    %449 = vmatpush1.msra.mxu0 %v35
    %450 = vmatprep.subr.mxu0 0.0
    %451 = vmatpush2.msra.mxu0 0.0
    %452 = vmatprep.subr.mxu0 0.0
    %453 = vmatpush2.msra.mxu0 0.0
    %454 = vmatprep.subr.mxu0 0.0
    %455 = vmatpush2.msra.mxu0 0.0
    %456 = vmatprep.subr.mxu0 0.0
    %457 = vmatpush2.msra.mxu0 0.0
    %458 = vmatprep.subr.mxu0 0.0
    %459 = vmatpush2.msra.mxu0 0.0
    %460 = vmatprep.subr.mxu0 0.0
    %461 = vmatpush2.msra.mxu0 0.0
    %462 = vmatprep.subr.mxu0 0.0
    %463 = vmatpush2.msra.mxu0 0.0
    %464 = vmatprep.subr.mxu0 0.0
    %465 = vmatpush2.msra.mxu0 0.0
    %466 = vmatprep.subr.mxu0 0.0
    %467 = vmatpush2.msra.mxu0 0.0
    %468 = vmatprep.subr.mxu0 0.0
    %469 = vmatpush2.msra.mxu0 0.0
    %470 = vmatprep.subr.mxu0 0.0
    %471 = vmatpush2.msra.mxu0 0.0
    %472 = vmatprep.subr.mxu0 0.0
    %473 = vmatpush2.msra.mxu0 0.0
    %474 = vmatprep.subr.mxu0 0.0
    %475 = vmatpush2.msra.mxu0 0.0
    %476 = vmatprep.subr.mxu0 0.0
    %477 = vmatpush2.msra.mxu0 0.0
    %478 = vmatprep.subr.mxu0 0.0
    %479 = vmatpush2.msra.mxu0 0.0
    %480 = vmatprep.subr.mxu0 0.0
    %481 = vmatpush2.msra.mxu0 0.0
    %482 = vmatprep.mubr.f32.mxu0 0.0
    %483 = vmatmul.mubr.f32.gmra.mxu0 %v416
    %v484 = vpop.f32.mrf.mxu0
    %v485 = vadd.f32 0.0, %v484
    %v486 = vpop.f32.mrf.mxu0
    %487 = vdwg.mxu0
    %489 = vrot.lane.b32.xlu0 %v412, 32
    %v490 = vpop.permute.xlu0 %489
    %v491 = vsel %vm47, %v490, 0
    %493 = vmatprep.subr.mxu0 0.0
    %494 = vmatpush1.msra.mxu0 0.0
    %495 = vmatprep.subr.mxu0 0.0
    %496 = vmatpush1.msra.mxu0 0.0
    %497 = vmatprep.subr.mxu0 0.0
    %498 = vmatpush1.msra.mxu0 0.0
    %499 = vmatprep.subr.mxu0 0.0
    %500 = vmatpush1.msra.mxu0 0.0
    %501 = vmatprep.subr.mxu0 0.0
    %502 = vmatpush1.msra.mxu0 0.0
    %503 = vmatprep.subr.mxu0 0.0
    %504 = vmatpush1.msra.mxu0 0.0
    %505 = vmatprep.subr.mxu0 0.0
    %506 = vmatpush1.msra.mxu0 0.0
    %507 = vmatprep.subr.mxu0 0.0
    %508 = vmatpush1.msra.mxu0 0.0
    %509 = vmatprep.subr.mxu0 0.0
    %510 = vmatpush1.msra.mxu0 0.0
    %511 = vmatprep.subr.mxu0 0.0
    %512 = vmatpush1.msra.mxu0 0.0
    %513 = vmatprep.subr.mxu0 0.0
    %514 = vmatpush1.msra.mxu0 0.0
    %515 = vmatprep.subr.mxu0 0.0
    %516 = vmatpush1.msra.mxu0 0.0
    %517 = vmatprep.subr.mxu0 0.0
    %518 = vmatpush1.msra.mxu0 %v34
    %519 = vmatprep.subr.mxu0 0.0
    %520 = vmatpush1.msra.mxu0 %v33
    %521 = vmatprep.subr.mxu0 0.0
    %522 = vmatpush1.msra.mxu0 %v32
    %523 = vmatprep.subr.mxu0 0.0
    %524 = vmatpush1.msra.mxu0 %v31
    %525 = vmatprep.subr.mxu0 0.0
    %526 = vmatpush2.msra.mxu0 0.0
    %527 = vmatprep.subr.mxu0 0.0
    %528 = vmatpush2.msra.mxu0 0.0
    %529 = vmatprep.subr.mxu0 0.0
    %530 = vmatpush2.msra.mxu0 0.0
    %531 = vmatprep.subr.mxu0 0.0
    %532 = vmatpush2.msra.mxu0 0.0
    %533 = vmatprep.subr.mxu0 0.0
    %534 = vmatpush2.msra.mxu0 0.0
    %535 = vmatprep.subr.mxu0 0.0
    %536 = vmatpush2.msra.mxu0 0.0
    %537 = vmatprep.subr.mxu0 0.0
    %538 = vmatpush2.msra.mxu0 0.0
    %539 = vmatprep.subr.mxu0 0.0
    %540 = vmatpush2.msra.mxu0 0.0
    %541 = vmatprep.subr.mxu0 0.0
    %542 = vmatpush2.msra.mxu0 0.0
    %543 = vmatprep.subr.mxu0 0.0
    %544 = vmatpush2.msra.mxu0 0.0
    %545 = vmatprep.subr.mxu0 0.0
    %546 = vmatpush2.msra.mxu0 0.0
    %547 = vmatprep.subr.mxu0 0.0
    %548 = vmatpush2.msra.mxu0 0.0
    %549 = vmatprep.subr.mxu0 0.0
    %550 = vmatpush2.msra.mxu0 0.0
    %551 = vmatprep.subr.mxu0 0.0
    %552 = vmatpush2.msra.mxu0 0.0
    %553 = vmatprep.subr.mxu0 0.0
    %554 = vmatpush2.msra.mxu0 0.0
    %555 = vmatprep.subr.mxu0 0.0
    %556 = vmatpush2.msra.mxu0 0.0
    %557 = vmatprep.mubr.f32.mxu0 0.0
    %558 = vmatmul.mubr.f32.gmra.mxu0 %v491
    %v559 = vpop.f32.mrf.mxu0
    %v560 = vadd.f32 %v485, %v559
    %v561 = vpop.f32.mrf.mxu0
    %562 = vdwg.mxu0
    %v563 = vadd.f32 %v560, %v44
    %v564 = vxor.u32 %v563, 2147483648
    %v565 = vmul.f32 %v564, 1.442695
    %v566 = vpow.pop %v565
    %v567 = vadd.f32 %v566, 1.0
    %v568 = vrcp.pop %v567
    %v569 = vmul.f32 1.0, %v568
    %v570 = vtanh.pop %v563
    %v571 = vmul.f32 %v569, %v309
    %573 = vrot.lane.b32.xlu0 %v570, 64
    %v574 = vpop.permute.xlu0 %573
    %v576 = vmul.f32 %v569, %v574
    %578 = vrot.lane.b32.xlu0 %v576, 32
    %v579 = vpop.permute.xlu0 %578
    %v581 = vadd.f32 %v571, %v579
    %v582 = vtanh.pop %v581
    %584 = vrot.lane.b32.xlu0 %v582, 64
    %v585 = vpop.permute.xlu0 %584
    %v587 = vmul.f32 %v569, %v585
    %s588 = scalar_lea.vmem %s0, 4
    %v589 = vld [vmem:[%s588] sm:$0x3]
    %590 = vmatprep.subr.mxu0 0.0
    %591 = vmatpush1.msra.mxu0 0.0
    %592 = vmatprep.subr.mxu0 0.0
    %593 = vmatpush1.msra.mxu0 0.0
    %594 = vmatprep.subr.mxu0 0.0
    %595 = vmatpush1.msra.mxu0 0.0
    %596 = vmatprep.subr.mxu0 0.0
    %597 = vmatpush1.msra.mxu0 0.0
    %598 = vmatprep.subr.mxu0 0.0
    %599 = vmatpush1.msra.mxu0 0.0
    %600 = vmatprep.subr.mxu0 0.0
    %601 = vmatpush1.msra.mxu0 0.0
    %602 = vmatprep.subr.mxu0 0.0
    %603 = vmatpush1.msra.mxu0 0.0
    %604 = vmatprep.subr.mxu0 0.0
    %605 = vmatpush1.msra.mxu0 0.0
    %606 = vmatprep.subr.mxu0 0.0
    %607 = vmatpush1.msra.mxu0 0.0
    %608 = vmatprep.subr.mxu0 0.0
    %609 = vmatpush1.msra.mxu0 0.0
    %610 = vmatprep.subr.mxu0 0.0
    %611 = vmatpush1.msra.mxu0 0.0
    %612 = vmatprep.subr.mxu0 0.0
    %613 = vmatpush1.msra.mxu0 0.0
    %614 = vmatprep.subr.mxu0 0.0
    %615 = vmatpush1.msra.mxu0 %v30
    %616 = vmatprep.subr.mxu0 0.0
    %617 = vmatpush1.msra.mxu0 %v29
    %618 = vmatprep.subr.mxu0 0.0
    %619 = vmatpush1.msra.mxu0 %v28
    %620 = vmatprep.subr.mxu0 0.0
    %621 = vmatpush1.msra.mxu0 %v27
    %622 = vmatprep.subr.mxu0 0.0
    %623 = vmatpush2.msra.mxu0 0.0
    %624 = vmatprep.subr.mxu0 0.0
    %625 = vmatpush2.msra.mxu0 0.0
    %626 = vmatprep.subr.mxu0 0.0
    %627 = vmatpush2.msra.mxu0 0.0
    %628 = vmatprep.subr.mxu0 0.0
    %629 = vmatpush2.msra.mxu0 0.0
    %630 = vmatprep.subr.mxu0 0.0
    %631 = vmatpush2.msra.mxu0 0.0
    %632 = vmatprep.subr.mxu0 0.0
    %633 = vmatpush2.msra.mxu0 0.0
    %634 = vmatprep.subr.mxu0 0.0
    %635 = vmatpush2.msra.mxu0 0.0
    %636 = vmatprep.subr.mxu0 0.0
    %637 = vmatpush2.msra.mxu0 0.0
    %638 = vmatprep.subr.mxu0 0.0
    %639 = vmatpush2.msra.mxu0 0.0
    %640 = vmatprep.subr.mxu0 0.0
    %641 = vmatpush2.msra.mxu0 0.0
    %642 = vmatprep.subr.mxu0 0.0
    %643 = vmatpush2.msra.mxu0 0.0
    %644 = vmatprep.subr.mxu0 0.0
    %645 = vmatpush2.msra.mxu0 0.0
    %646 = vmatprep.subr.mxu0 0.0
    %647 = vmatpush2.msra.mxu0 0.0
    %648 = vmatprep.subr.mxu0 0.0
    %649 = vmatpush2.msra.mxu0 0.0
    %650 = vmatprep.subr.mxu0 0.0
    %651 = vmatpush2.msra.mxu0 0.0
    %652 = vmatprep.subr.mxu0 0.0
    %653 = vmatpush2.msra.mxu0 0.0
    %654 = vmatprep.mubr.f32.mxu0 0.0
    %655 = vmatmul.mubr.f32.gmra.mxu0 %v491
    %v656 = vpop.f32.mrf.mxu0
    %v657 = vadd.f32 0.0, %v656
    %v658 = vpop.f32.mrf.mxu0
    %659 = vdwg.mxu0
    %v660 = vadd.f32 %v589, %v657
    %v661 = vxor.u32 %v660, 2147483648
    %v662 = vmul.f32 %v661, 1.442695
    %v663 = vpow.pop %v662
    %v664 = vadd.f32 %v663, 1.0
    %v665 = vrcp.pop %v664
    %v666 = vmul.f32 1.0, %v665
    %v667 = vtanh.pop %v660
    %v668 = vmul.f32 %v666, %v406
    %670 = vrot.lane.b32.xlu0 %v667, 64
    %v671 = vpop.permute.xlu0 %670
    %v673 = vmul.f32 %v666, %v671
    %675 = vrot.lane.b32.xlu0 %v673, 32
    %v676 = vpop.permute.xlu0 %675
    %v678 = vadd.f32 %v668, %v676
    %v679 = vtanh.pop %v678
    %681 = vrot.lane.b32.xlu0 %v679, 64
    %v682 = vpop.permute.xlu0 %681
    %v684 = vmul.f32 %v666, %v682
    %686 = vrot.lane.b32.xlu0 %v587, 32
    %v687 = vpop.permute.xlu0 %686
    %v688 = vsel %vm47, %v687, 0
    %690 = vmatprep.subr.mxu0 0.0
    %691 = vmatpush1.msra.mxu0 0.0
    %692 = vmatprep.subr.mxu0 0.0
    %693 = vmatpush1.msra.mxu0 0.0
    %694 = vmatprep.subr.mxu0 0.0
    %695 = vmatpush1.msra.mxu0 0.0
    %696 = vmatprep.subr.mxu0 0.0
    %697 = vmatpush1.msra.mxu0 0.0
    %698 = vmatprep.subr.mxu0 0.0
    %699 = vmatpush1.msra.mxu0 0.0
    %700 = vmatprep.subr.mxu0 0.0
    %701 = vmatpush1.msra.mxu0 0.0
    %702 = vmatprep.subr.mxu0 0.0
    %703 = vmatpush1.msra.mxu0 0.0
    %704 = vmatprep.subr.mxu0 0.0
    %705 = vmatpush1.msra.mxu0 0.0
    %706 = vmatprep.subr.mxu0 0.0
    %707 = vmatpush1.msra.mxu0 0.0
    %708 = vmatprep.subr.mxu0 0.0
    %709 = vmatpush1.msra.mxu0 0.0
    %710 = vmatprep.subr.mxu0 0.0
    %711 = vmatpush1.msra.mxu0 0.0
    %712 = vmatprep.subr.mxu0 0.0
    %713 = vmatpush1.msra.mxu0 0.0
    %714 = vmatprep.subr.mxu0 0.0
    %715 = vmatpush1.msra.mxu0 %v38
    %716 = vmatprep.subr.mxu0 0.0
    %717 = vmatpush1.msra.mxu0 %v37
    %718 = vmatprep.subr.mxu0 0.0
    %719 = vmatpush1.msra.mxu0 %v36
    %720 = vmatprep.subr.mxu0 0.0
    %721 = vmatpush1.msra.mxu0 %v35
    %722 = vmatprep.subr.mxu0 0.0
    %723 = vmatpush2.msra.mxu0 0.0
    %724 = vmatprep.subr.mxu0 0.0
    %725 = vmatpush2.msra.mxu0 0.0
    %726 = vmatprep.subr.mxu0 0.0
    %727 = vmatpush2.msra.mxu0 0.0
    %728 = vmatprep.subr.mxu0 0.0
    %729 = vmatpush2.msra.mxu0 0.0
    %730 = vmatprep.subr.mxu0 0.0
    %731 = vmatpush2.msra.mxu0 0.0
    %732 = vmatprep.subr.mxu0 0.0
    %733 = vmatpush2.msra.mxu0 0.0
    %734 = vmatprep.subr.mxu0 0.0
    %735 = vmatpush2.msra.mxu0 0.0
    %736 = vmatprep.subr.mxu0 0.0
    %737 = vmatpush2.msra.mxu0 0.0
    %738 = vmatprep.subr.mxu0 0.0
    %739 = vmatpush2.msra.mxu0 0.0
    %740 = vmatprep.subr.mxu0 0.0
    %741 = vmatpush2.msra.mxu0 0.0
    %742 = vmatprep.subr.mxu0 0.0
    %743 = vmatpush2.msra.mxu0 0.0
    %744 = vmatprep.subr.mxu0 0.0
    %745 = vmatpush2.msra.mxu0 0.0
    %746 = vmatprep.subr.mxu0 0.0
    %747 = vmatpush2.msra.mxu0 0.0
    %748 = vmatprep.subr.mxu0 0.0
    %749 = vmatpush2.msra.mxu0 0.0
    %750 = vmatprep.subr.mxu0 0.0
    %751 = vmatpush2.msra.mxu0 0.0
    %752 = vmatprep.subr.mxu0 0.0
    %753 = vmatpush2.msra.mxu0 0.0
    %754 = vmatprep.mubr.f32.mxu0 0.0
    %755 = vmatmul.mubr.f32.gmra.mxu0 %v688
    %v756 = vpop.f32.mrf.mxu0
    %v757 = vadd.f32 0.0, %v756
    %v758 = vpop.f32.mrf.mxu0
    %759 = vdwg.mxu0
    %761 = vrot.lane.b32.xlu0 %v684, 32
    %v762 = vpop.permute.xlu0 %761
    %v763 = vsel %vm47, %v762, 0
    %765 = vmatprep.subr.mxu0 0.0
    %766 = vmatpush1.msra.mxu0 0.0
    %767 = vmatprep.subr.mxu0 0.0
    %768 = vmatpush1.msra.mxu0 0.0
    %769 = vmatprep.subr.mxu0 0.0
    %770 = vmatpush1.msra.mxu0 0.0
    %771 = vmatprep.subr.mxu0 0.0
    %772 = vmatpush1.msra.mxu0 0.0
    %773 = vmatprep.subr.mxu0 0.0
    %774 = vmatpush1.msra.mxu0 0.0
    %775 = vmatprep.subr.mxu0 0.0
    %776 = vmatpush1.msra.mxu0 0.0
    %777 = vmatprep.subr.mxu0 0.0
    %778 = vmatpush1.msra.mxu0 0.0
    %779 = vmatprep.subr.mxu0 0.0
    %780 = vmatpush1.msra.mxu0 0.0
    %781 = vmatprep.subr.mxu0 0.0
    %782 = vmatpush1.msra.mxu0 0.0
    %783 = vmatprep.subr.mxu0 0.0
    %784 = vmatpush1.msra.mxu0 0.0
    %785 = vmatprep.subr.mxu0 0.0
    %786 = vmatpush1.msra.mxu0 0.0
    %787 = vmatprep.subr.mxu0 0.0
    %788 = vmatpush1.msra.mxu0 0.0
    %789 = vmatprep.subr.mxu0 0.0
    %790 = vmatpush1.msra.mxu0 %v34
    %791 = vmatprep.subr.mxu0 0.0
    %792 = vmatpush1.msra.mxu0 %v33
    %793 = vmatprep.subr.mxu0 0.0
    %794 = vmatpush1.msra.mxu0 %v32
    %795 = vmatprep.subr.mxu0 0.0
    %796 = vmatpush1.msra.mxu0 %v31
    %797 = vmatprep.subr.mxu0 0.0
    %798 = vmatpush2.msra.mxu0 0.0
    %799 = vmatprep.subr.mxu0 0.0
    %800 = vmatpush2.msra.mxu0 0.0
    %801 = vmatprep.subr.mxu0 0.0
    %802 = vmatpush2.msra.mxu0 0.0
    %803 = vmatprep.subr.mxu0 0.0
    %804 = vmatpush2.msra.mxu0 0.0
    %805 = vmatprep.subr.mxu0 0.0
    %806 = vmatpush2.msra.mxu0 0.0
    %807 = vmatprep.subr.mxu0 0.0
    %808 = vmatpush2.msra.mxu0 0.0
    %809 = vmatprep.subr.mxu0 0.0
    %810 = vmatpush2.msra.mxu0 0.0
    %811 = vmatprep.subr.mxu0 0.0
    %812 = vmatpush2.msra.mxu0 0.0
    %813 = vmatprep.subr.mxu0 0.0
    %814 = vmatpush2.msra.mxu0 0.0
    %815 = vmatprep.subr.mxu0 0.0
    %816 = vmatpush2.msra.mxu0 0.0
    %817 = vmatprep.subr.mxu0 0.0
    %818 = vmatpush2.msra.mxu0 0.0
    %819 = vmatprep.subr.mxu0 0.0
    %820 = vmatpush2.msra.mxu0 0.0
    %821 = vmatprep.subr.mxu0 0.0
    %822 = vmatpush2.msra.mxu0 0.0
    %823 = vmatprep.subr.mxu0 0.0
    %824 = vmatpush2.msra.mxu0 0.0
    %825 = vmatprep.subr.mxu0 0.0
    %826 = vmatpush2.msra.mxu0 0.0
    %827 = vmatprep.subr.mxu0 0.0
    %828 = vmatpush2.msra.mxu0 0.0
    %829 = vmatprep.mubr.f32.mxu0 0.0
    %830 = vmatmul.mubr.f32.gmra.mxu0 %v763
    %v831 = vpop.f32.mrf.mxu0
    %v832 = vadd.f32 %v757, %v831
    %v833 = vpop.f32.mrf.mxu0
    %834 = vdwg.mxu0
    %v835 = vadd.f32 %v832, %v44
    %v836 = vxor.u32 %v835, 2147483648
    %v837 = vmul.f32 %v836, 1.442695
    %v838 = vpow.pop %v837
    %v839 = vadd.f32 %v838, 1.0
    %v840 = vrcp.pop %v839
    %v841 = vmul.f32 1.0, %v840
    %v842 = vtanh.pop %v835
    %v843 = vmul.f32 %v841, %v581
    %845 = vrot.lane.b32.xlu0 %v842, 64
    %v846 = vpop.permute.xlu0 %845
    %v848 = vmul.f32 %v841, %v846
    %850 = vrot.lane.b32.xlu0 %v848, 32
    %v851 = vpop.permute.xlu0 %850
    %v853 = vadd.f32 %v843, %v851
    %v854 = vtanh.pop %v853
    %856 = vrot.lane.b32.xlu0 %v854, 64
    %v857 = vpop.permute.xlu0 %856
    %v859 = vmul.f32 %v841, %v857
    %s860 = scalar_lea.vmem %s0, 6
    %v861 = vld [vmem:[%s860] sm:$0x3]
    %862 = vmatprep.subr.mxu0 0.0
    %863 = vmatpush1.msra.mxu0 0.0
    %864 = vmatprep.subr.mxu0 0.0
    %865 = vmatpush1.msra.mxu0 0.0
    %866 = vmatprep.subr.mxu0 0.0
    %867 = vmatpush1.msra.mxu0 0.0
    %868 = vmatprep.subr.mxu0 0.0
    %869 = vmatpush1.msra.mxu0 0.0
    %870 = vmatprep.subr.mxu0 0.0
    %871 = vmatpush1.msra.mxu0 0.0
    %872 = vmatprep.subr.mxu0 0.0
    %873 = vmatpush1.msra.mxu0 0.0
    %874 = vmatprep.subr.mxu0 0.0
    %875 = vmatpush1.msra.mxu0 0.0
    %876 = vmatprep.subr.mxu0 0.0
    %877 = vmatpush1.msra.mxu0 0.0
    %878 = vmatprep.subr.mxu0 0.0
    %879 = vmatpush1.msra.mxu0 0.0
    %880 = vmatprep.subr.mxu0 0.0
    %881 = vmatpush1.msra.mxu0 0.0
    %882 = vmatprep.subr.mxu0 0.0
    %883 = vmatpush1.msra.mxu0 0.0
    %884 = vmatprep.subr.mxu0 0.0
    %885 = vmatpush1.msra.mxu0 0.0
    %886 = vmatprep.subr.mxu0 0.0
    %887 = vmatpush1.msra.mxu0 %v30
    %888 = vmatprep.subr.mxu0 0.0
    %889 = vmatpush1.msra.mxu0 %v29
    %890 = vmatprep.subr.mxu0 0.0
    %891 = vmatpush1.msra.mxu0 %v28
    %892 = vmatprep.subr.mxu0 0.0
    %893 = vmatpush1.msra.mxu0 %v27
    %894 = vmatprep.subr.mxu0 0.0
    %895 = vmatpush2.msra.mxu0 0.0
    %896 = vmatprep.subr.mxu0 0.0
    %897 = vmatpush2.msra.mxu0 0.0
    %898 = vmatprep.subr.mxu0 0.0
    %899 = vmatpush2.msra.mxu0 0.0
    %900 = vmatprep.subr.mxu0 0.0
    %901 = vmatpush2.msra.mxu0 0.0
    %902 = vmatprep.subr.mxu0 0.0
    %903 = vmatpush2.msra.mxu0 0.0
    %904 = vmatprep.subr.mxu0 0.0
    %905 = vmatpush2.msra.mxu0 0.0
    %906 = vmatprep.subr.mxu0 0.0
    %907 = vmatpush2.msra.mxu0 0.0
    %908 = vmatprep.subr.mxu0 0.0
    %909 = vmatpush2.msra.mxu0 0.0
    %910 = vmatprep.subr.mxu0 0.0
    %911 = vmatpush2.msra.mxu0 0.0
    %912 = vmatprep.subr.mxu0 0.0
    %913 = vmatpush2.msra.mxu0 0.0
    %914 = vmatprep.subr.mxu0 0.0
    %915 = vmatpush2.msra.mxu0 0.0
    %916 = vmatprep.subr.mxu0 0.0
    %917 = vmatpush2.msra.mxu0 0.0
    %918 = vmatprep.subr.mxu0 0.0
    %919 = vmatpush2.msra.mxu0 0.0
    %920 = vmatprep.subr.mxu0 0.0
    %921 = vmatpush2.msra.mxu0 0.0
    %922 = vmatprep.subr.mxu0 0.0
    %923 = vmatpush2.msra.mxu0 0.0
    %924 = vmatprep.subr.mxu0 0.0
    %925 = vmatpush2.msra.mxu0 0.0
    %926 = vmatprep.mubr.f32.mxu0 0.0
    %927 = vmatmul.mubr.f32.gmra.mxu0 %v763
    %v928 = vpop.f32.mrf.mxu0
    %v929 = vadd.f32 0.0, %v928
    %v930 = vpop.f32.mrf.mxu0
    %931 = vdwg.mxu0
    %v932 = vadd.f32 %v861, %v929
    %v933 = vxor.u32 %v932, 2147483648
    %v934 = vmul.f32 %v933, 1.442695
    %v935 = vpow.pop %v934
    %v936 = vadd.f32 %v935, 1.0
    %v937 = vrcp.pop %v936
    %v938 = vmul.f32 1.0, %v937
    %v939 = vtanh.pop %v932
    %v940 = vmul.f32 %v938, %v678
    %942 = vrot.lane.b32.xlu0 %v939, 64
    %v943 = vpop.permute.xlu0 %942
    %v945 = vmul.f32 %v938, %v943
    %947 = vrot.lane.b32.xlu0 %v945, 32
    %v948 = vpop.permute.xlu0 %947
    %v950 = vadd.f32 %v940, %v948
    %v951 = vtanh.pop %v950
    %953 = vrot.lane.b32.xlu0 %v951, 64
    %v954 = vpop.permute.xlu0 %953
    %v956 = vmul.f32 %v938, %v954
    %958 = vrot.lane.b32.xlu0 %v859, 32
    %v959 = vpop.permute.xlu0 %958
    %v960 = vsel %vm47, %v959, 0
    %962 = vmatprep.subr.mxu0 0.0
    %963 = vmatpush1.msra.mxu0 0.0
    %964 = vmatprep.subr.mxu0 0.0
    %965 = vmatpush1.msra.mxu0 0.0
    %966 = vmatprep.subr.mxu0 0.0
    %967 = vmatpush1.msra.mxu0 0.0
    %968 = vmatprep.subr.mxu0 0.0
    %969 = vmatpush1.msra.mxu0 0.0
    %970 = vmatprep.subr.mxu0 0.0
    %971 = vmatpush1.msra.mxu0 0.0
    %972 = vmatprep.subr.mxu0 0.0
    %973 = vmatpush1.msra.mxu0 0.0
    %974 = vmatprep.subr.mxu0 0.0
    %975 = vmatpush1.msra.mxu0 0.0
    %976 = vmatprep.subr.mxu0 0.0
    %977 = vmatpush1.msra.mxu0 0.0
    %978 = vmatprep.subr.mxu0 0.0
    %979 = vmatpush1.msra.mxu0 0.0
    %980 = vmatprep.subr.mxu0 0.0
    %981 = vmatpush1.msra.mxu0 0.0
    %982 = vmatprep.subr.mxu0 0.0
    %983 = vmatpush1.msra.mxu0 0.0
    %984 = vmatprep.subr.mxu0 0.0
    %985 = vmatpush1.msra.mxu0 0.0
    %986 = vmatprep.subr.mxu0 0.0
    %987 = vmatpush1.msra.mxu0 %v38
    %988 = vmatprep.subr.mxu0 0.0
    %989 = vmatpush1.msra.mxu0 %v37
    %990 = vmatprep.subr.mxu0 0.0
    %991 = vmatpush1.msra.mxu0 %v36
    %992 = vmatprep.subr.mxu0 0.0
    %993 = vmatpush1.msra.mxu0 %v35
    %994 = vmatprep.subr.mxu0 0.0
    %995 = vmatpush2.msra.mxu0 0.0
    %996 = vmatprep.subr.mxu0 0.0
    %997 = vmatpush2.msra.mxu0 0.0
    %998 = vmatprep.subr.mxu0 0.0
    %999 = vmatpush2.msra.mxu0 0.0
    %1000 = vmatprep.subr.mxu0 0.0
    %1001 = vmatpush2.msra.mxu0 0.0
    %1002 = vmatprep.subr.mxu0 0.0
    %1003 = vmatpush2.msra.mxu0 0.0
    %1004 = vmatprep.subr.mxu0 0.0
    %1005 = vmatpush2.msra.mxu0 0.0
    %1006 = vmatprep.subr.mxu0 0.0
    %1007 = vmatpush2.msra.mxu0 0.0
    %1008 = vmatprep.subr.mxu0 0.0
    %1009 = vmatpush2.msra.mxu0 0.0
    %1010 = vmatprep.subr.mxu0 0.0
    %1011 = vmatpush2.msra.mxu0 0.0
    %1012 = vmatprep.subr.mxu0 0.0
    %1013 = vmatpush2.msra.mxu0 0.0
    %1014 = vmatprep.subr.mxu0 0.0
    %1015 = vmatpush2.msra.mxu0 0.0
    %1016 = vmatprep.subr.mxu0 0.0
    %1017 = vmatpush2.msra.mxu0 0.0
    %1018 = vmatprep.subr.mxu0 0.0
    %1019 = vmatpush2.msra.mxu0 0.0
    %1020 = vmatprep.subr.mxu0 0.0
    %1021 = vmatpush2.msra.mxu0 0.0
    %1022 = vmatprep.subr.mxu0 0.0
    %1023 = vmatpush2.msra.mxu0 0.0
    %1024 = vmatprep.subr.mxu0 0.0
    %1025 = vmatpush2.msra.mxu0 0.0
    %1026 = vmatprep.mubr.f32.mxu0 0.0
    %1027 = vmatmul.mubr.f32.gmra.mxu0 %v960
    %v1028 = vpop.f32.mrf.mxu0
    %v1029 = vadd.f32 0.0, %v1028
    %v1030 = vpop.f32.mrf.mxu0
    %1031 = vdwg.mxu0
    %1033 = vrot.lane.b32.xlu0 %v956, 32
    %v1034 = vpop.permute.xlu0 %1033
    %v1035 = vsel %vm47, %v1034, 0
    %1037 = vmatprep.subr.mxu0 0.0
    %1038 = vmatpush1.msra.mxu0 0.0
    %1039 = vmatprep.subr.mxu0 0.0
    %1040 = vmatpush1.msra.mxu0 0.0
    %1041 = vmatprep.subr.mxu0 0.0
    %1042 = vmatpush1.msra.mxu0 0.0
    %1043 = vmatprep.subr.mxu0 0.0
    %1044 = vmatpush1.msra.mxu0 0.0
    %1045 = vmatprep.subr.mxu0 0.0
    %1046 = vmatpush1.msra.mxu0 0.0
    %1047 = vmatprep.subr.mxu0 0.0
    %1048 = vmatpush1.msra.mxu0 0.0
    %1049 = vmatprep.subr.mxu0 0.0
    %1050 = vmatpush1.msra.mxu0 0.0
    %1051 = vmatprep.subr.mxu0 0.0
    %1052 = vmatpush1.msra.mxu0 0.0
    %1053 = vmatprep.subr.mxu0 0.0
    %1054 = vmatpush1.msra.mxu0 0.0
    %1055 = vmatprep.subr.mxu0 0.0
    %1056 = vmatpush1.msra.mxu0 0.0
    %1057 = vmatprep.subr.mxu0 0.0
    %1058 = vmatpush1.msra.mxu0 0.0
    %1059 = vmatprep.subr.mxu0 0.0
    %1060 = vmatpush1.msra.mxu0 0.0
    %1061 = vmatprep.subr.mxu0 0.0
    %1062 = vmatpush1.msra.mxu0 %v34
    %1063 = vmatprep.subr.mxu0 0.0
    %1064 = vmatpush1.msra.mxu0 %v33
    %1065 = vmatprep.subr.mxu0 0.0
    %1066 = vmatpush1.msra.mxu0 %v32
    %1067 = vmatprep.subr.mxu0 0.0
    %1068 = vmatpush1.msra.mxu0 %v31
    %1069 = vmatprep.subr.mxu0 0.0
    %1070 = vmatpush2.msra.mxu0 0.0
    %1071 = vmatprep.subr.mxu0 0.0
    %1072 = vmatpush2.msra.mxu0 0.0
    %1073 = vmatprep.subr.mxu0 0.0
    %1074 = vmatpush2.msra.mxu0 0.0
    %1075 = vmatprep.subr.mxu0 0.0
    %1076 = vmatpush2.msra.mxu0 0.0
    %1077 = vmatprep.subr.mxu0 0.0
    %1078 = vmatpush2.msra.mxu0 0.0
    %1079 = vmatprep.subr.mxu0 0.0
    %1080 = vmatpush2.msra.mxu0 0.0
    %1081 = vmatprep.subr.mxu0 0.0
    %1082 = vmatpush2.msra.mxu0 0.0
    %1083 = vmatprep.subr.mxu0 0.0
    %1084 = vmatpush2.msra.mxu0 0.0
    %1085 = vmatprep.subr.mxu0 0.0
    %1086 = vmatpush2.msra.mxu0 0.0
    %1087 = vmatprep.subr.mxu0 0.0
    %1088 = vmatpush2.msra.mxu0 0.0
    %1089 = vmatprep.subr.mxu0 0.0
    %1090 = vmatpush2.msra.mxu0 0.0
    %1091 = vmatprep.subr.mxu0 0.0
    %1092 = vmatpush2.msra.mxu0 0.0
    %1093 = vmatprep.subr.mxu0 0.0
    %1094 = vmatpush2.msra.mxu0 0.0
    %1095 = vmatprep.subr.mxu0 0.0
    %1096 = vmatpush2.msra.mxu0 0.0
    %1097 = vmatprep.subr.mxu0 0.0
    %1098 = vmatpush2.msra.mxu0 0.0
    %1099 = vmatprep.subr.mxu0 0.0
    %1100 = vmatpush2.msra.mxu0 0.0
    %1101 = vmatprep.mubr.f32.mxu0 0.0
    %1102 = vmatmul.mubr.f32.gmra.mxu0 %v1035
    %v1103 = vpop.f32.mrf.mxu0
    %v1104 = vadd.f32 %v1029, %v1103
    %v1105 = vpop.f32.mrf.mxu0
    %1106 = vdwg.mxu0
    %v1107 = vadd.f32 %v1104, %v44
    %v1108 = vxor.u32 %v1107, 2147483648
    %v1109 = vmul.f32 %v1108, 1.442695
    %v1110 = vpow.pop %v1109
    %v1111 = vadd.f32 %v1110, 1.0
    %v1112 = vrcp.pop %v1111
    %v1113 = vmul.f32 1.0, %v1112
    %v1114 = vtanh.pop %v1107
    %v1115 = vmul.f32 %v1113, %v853
    %1117 = vrot.lane.b32.xlu0 %v1114, 64
    %v1118 = vpop.permute.xlu0 %1117
    %v1120 = vmul.f32 %v1113, %v1118
    %1122 = vrot.lane.b32.xlu0 %v1120, 32
    %v1123 = vpop.permute.xlu0 %1122
    %v1125 = vadd.f32 %v1115, %v1123
    %v1126 = vtanh.pop %v1125
    %1128 = vrot.lane.b32.xlu0 %v1126, 64
    %v1129 = vpop.permute.xlu0 %1128
    %v1131 = vmul.f32 %v1113, %v1129
    %s1132 = scalar_lea.vmem %s0, 8
    %v1133 = vld [vmem:[%s1132] sm:$0x3]
    %1134 = vmatprep.subr.mxu0 0.0
    %1135 = vmatpush1.msra.mxu0 0.0
    %1136 = vmatprep.subr.mxu0 0.0
    %1137 = vmatpush1.msra.mxu0 0.0
    %1138 = vmatprep.subr.mxu0 0.0
    %1139 = vmatpush1.msra.mxu0 0.0
    %1140 = vmatprep.subr.mxu0 0.0
    %1141 = vmatpush1.msra.mxu0 0.0
    %1142 = vmatprep.subr.mxu0 0.0
    %1143 = vmatpush1.msra.mxu0 0.0
    %1144 = vmatprep.subr.mxu0 0.0
    %1145 = vmatpush1.msra.mxu0 0.0
    %1146 = vmatprep.subr.mxu0 0.0
    %1147 = vmatpush1.msra.mxu0 0.0
    %1148 = vmatprep.subr.mxu0 0.0
    %1149 = vmatpush1.msra.mxu0 0.0
    %1150 = vmatprep.subr.mxu0 0.0
    %1151 = vmatpush1.msra.mxu0 0.0
    %1152 = vmatprep.subr.mxu0 0.0
    %1153 = vmatpush1.msra.mxu0 0.0
    %1154 = vmatprep.subr.mxu0 0.0
    %1155 = vmatpush1.msra.mxu0 0.0
    %1156 = vmatprep.subr.mxu0 0.0
    %1157 = vmatpush1.msra.mxu0 0.0
    %1158 = vmatprep.subr.mxu0 0.0
    %1159 = vmatpush1.msra.mxu0 %v30
    %1160 = vmatprep.subr.mxu0 0.0
    %1161 = vmatpush1.msra.mxu0 %v29
    %1162 = vmatprep.subr.mxu0 0.0
    %1163 = vmatpush1.msra.mxu0 %v28
    %1164 = vmatprep.subr.mxu0 0.0
    %1165 = vmatpush1.msra.mxu0 %v27
    %1166 = vmatprep.subr.mxu0 0.0
    %1167 = vmatpush2.msra.mxu0 0.0
    %1168 = vmatprep.subr.mxu0 0.0
    %1169 = vmatpush2.msra.mxu0 0.0
    %1170 = vmatprep.subr.mxu0 0.0
    %1171 = vmatpush2.msra.mxu0 0.0
    %1172 = vmatprep.subr.mxu0 0.0
    %1173 = vmatpush2.msra.mxu0 0.0
    %1174 = vmatprep.subr.mxu0 0.0
    %1175 = vmatpush2.msra.mxu0 0.0
    %1176 = vmatprep.subr.mxu0 0.0
    %1177 = vmatpush2.msra.mxu0 0.0
    %1178 = vmatprep.subr.mxu0 0.0
    %1179 = vmatpush2.msra.mxu0 0.0
    %1180 = vmatprep.subr.mxu0 0.0
    %1181 = vmatpush2.msra.mxu0 0.0
    %1182 = vmatprep.subr.mxu0 0.0
    %1183 = vmatpush2.msra.mxu0 0.0
    %1184 = vmatprep.subr.mxu0 0.0
    %1185 = vmatpush2.msra.mxu0 0.0
    %1186 = vmatprep.subr.mxu0 0.0
    %1187 = vmatpush2.msra.mxu0 0.0
    %1188 = vmatprep.subr.mxu0 0.0
    %1189 = vmatpush2.msra.mxu0 0.0
    %1190 = vmatprep.subr.mxu0 0.0
    %1191 = vmatpush2.msra.mxu0 0.0
    %1192 = vmatprep.subr.mxu0 0.0
    %1193 = vmatpush2.msra.mxu0 0.0
    %1194 = vmatprep.subr.mxu0 0.0
    %1195 = vmatpush2.msra.mxu0 0.0
    %1196 = vmatprep.subr.mxu0 0.0
    %1197 = vmatpush2.msra.mxu0 0.0
    %1198 = vmatprep.mubr.f32.mxu0 0.0
    %1199 = vmatmul.mubr.f32.gmra.mxu0 %v1035
    %v1200 = vpop.f32.mrf.mxu0
    %v1201 = vadd.f32 0.0, %v1200
    %v1202 = vpop.f32.mrf.mxu0
    %1203 = vdwg.mxu0
    %v1204 = vadd.f32 %v1133, %v1201
    %v1205 = vxor.u32 %v1204, 2147483648
    %v1206 = vmul.f32 %v1205, 1.442695
    %v1207 = vpow.pop %v1206
    %v1208 = vadd.f32 %v1207, 1.0
    %v1209 = vrcp.pop %v1208
    %v1210 = vmul.f32 1.0, %v1209
    %v1211 = vtanh.pop %v1204
    %v1212 = vmul.f32 %v1210, %v950
    %1214 = vrot.lane.b32.xlu0 %v1211, 64
    %v1215 = vpop.permute.xlu0 %1214
    %v1217 = vmul.f32 %v1210, %v1215
    %1219 = vrot.lane.b32.xlu0 %v1217, 32
    %v1220 = vpop.permute.xlu0 %1219
    %v1222 = vadd.f32 %v1212, %v1220
    %v1223 = vtanh.pop %v1222
    %1225 = vrot.lane.b32.xlu0 %v1223, 64
    %v1226 = vpop.permute.xlu0 %1225
    %v1228 = vmul.f32 %v1210, %v1226
    %1230 = vrot.lane.b32.xlu0 %v1131, 32
    %v1231 = vpop.permute.xlu0 %1230
    %v1232 = vsel %vm47, %v1231, 0
    %1234 = vmatprep.subr.mxu0 0.0
    %1235 = vmatpush1.msra.mxu0 0.0
    %1236 = vmatprep.subr.mxu0 0.0
    %1237 = vmatpush1.msra.mxu0 0.0
    %1238 = vmatprep.subr.mxu0 0.0
    %1239 = vmatpush1.msra.mxu0 0.0
    %1240 = vmatprep.subr.mxu0 0.0
    %1241 = vmatpush1.msra.mxu0 0.0
    %1242 = vmatprep.subr.mxu0 0.0
    %1243 = vmatpush1.msra.mxu0 0.0
    %1244 = vmatprep.subr.mxu0 0.0
    %1245 = vmatpush1.msra.mxu0 0.0
    %1246 = vmatprep.subr.mxu0 0.0
    %1247 = vmatpush1.msra.mxu0 0.0
    %1248 = vmatprep.subr.mxu0 0.0
    %1249 = vmatpush1.msra.mxu0 0.0
    %1250 = vmatprep.subr.mxu0 0.0
    %1251 = vmatpush1.msra.mxu0 0.0
    %1252 = vmatprep.subr.mxu0 0.0
    %1253 = vmatpush1.msra.mxu0 0.0
    %1254 = vmatprep.subr.mxu0 0.0
    %1255 = vmatpush1.msra.mxu0 0.0
    %1256 = vmatprep.subr.mxu0 0.0
    %1257 = vmatpush1.msra.mxu0 0.0
    %1258 = vmatprep.subr.mxu0 0.0
    %1259 = vmatpush1.msra.mxu0 %v38
    %1260 = vmatprep.subr.mxu0 0.0
    %1261 = vmatpush1.msra.mxu0 %v37
    %1262 = vmatprep.subr.mxu0 0.0
    %1263 = vmatpush1.msra.mxu0 %v36
    %1264 = vmatprep.subr.mxu0 0.0
    %1265 = vmatpush1.msra.mxu0 %v35
    %1266 = vmatprep.subr.mxu0 0.0
    %1267 = vmatpush2.msra.mxu0 0.0
    %1268 = vmatprep.subr.mxu0 0.0
    %1269 = vmatpush2.msra.mxu0 0.0
    %1270 = vmatprep.subr.mxu0 0.0
    %1271 = vmatpush2.msra.mxu0 0.0
    %1272 = vmatprep.subr.mxu0 0.0
    %1273 = vmatpush2.msra.mxu0 0.0
    %1274 = vmatprep.subr.mxu0 0.0
    %1275 = vmatpush2.msra.mxu0 0.0
    %1276 = vmatprep.subr.mxu0 0.0
    %1277 = vmatpush2.msra.mxu0 0.0
    %1278 = vmatprep.subr.mxu0 0.0
    %1279 = vmatpush2.msra.mxu0 0.0
    %1280 = vmatprep.subr.mxu0 0.0
    %1281 = vmatpush2.msra.mxu0 0.0
    %1282 = vmatprep.subr.mxu0 0.0
    %1283 = vmatpush2.msra.mxu0 0.0
    %1284 = vmatprep.subr.mxu0 0.0
    %1285 = vmatpush2.msra.mxu0 0.0
    %1286 = vmatprep.subr.mxu0 0.0
    %1287 = vmatpush2.msra.mxu0 0.0
    %1288 = vmatprep.subr.mxu0 0.0
    %1289 = vmatpush2.msra.mxu0 0.0
    %1290 = vmatprep.subr.mxu0 0.0
    %1291 = vmatpush2.msra.mxu0 0.0
    %1292 = vmatprep.subr.mxu0 0.0
    %1293 = vmatpush2.msra.mxu0 0.0
    %1294 = vmatprep.subr.mxu0 0.0
    %1295 = vmatpush2.msra.mxu0 0.0
    %1296 = vmatprep.subr.mxu0 0.0
    %1297 = vmatpush2.msra.mxu0 0.0
    %1298 = vmatprep.mubr.f32.mxu0 0.0
    %1299 = vmatmul.mubr.f32.gmra.mxu0 %v1232
    %v1300 = vpop.f32.mrf.mxu0
    %v1301 = vadd.f32 0.0, %v1300
    %v1302 = vpop.f32.mrf.mxu0
    %1303 = vdwg.mxu0
    %1305 = vrot.lane.b32.xlu0 %v1228, 32
    %v1306 = vpop.permute.xlu0 %1305
    %v1307 = vsel %vm47, %v1306, 0
    %1309 = vmatprep.subr.mxu0 0.0
    %1310 = vmatpush1.msra.mxu0 0.0
    %1311 = vmatprep.subr.mxu0 0.0
    %1312 = vmatpush1.msra.mxu0 0.0
    %1313 = vmatprep.subr.mxu0 0.0
    %1314 = vmatpush1.msra.mxu0 0.0
    %1315 = vmatprep.subr.mxu0 0.0
    %1316 = vmatpush1.msra.mxu0 0.0
    %1317 = vmatprep.subr.mxu0 0.0
    %1318 = vmatpush1.msra.mxu0 0.0
    %1319 = vmatprep.subr.mxu0 0.0
    %1320 = vmatpush1.msra.mxu0 0.0
    %1321 = vmatprep.subr.mxu0 0.0
    %1322 = vmatpush1.msra.mxu0 0.0
    %1323 = vmatprep.subr.mxu0 0.0
    %1324 = vmatpush1.msra.mxu0 0.0
    %1325 = vmatprep.subr.mxu0 0.0
    %1326 = vmatpush1.msra.mxu0 0.0
    %1327 = vmatprep.subr.mxu0 0.0
    %1328 = vmatpush1.msra.mxu0 0.0
    %1329 = vmatprep.subr.mxu0 0.0
    %1330 = vmatpush1.msra.mxu0 0.0
    %1331 = vmatprep.subr.mxu0 0.0
    %1332 = vmatpush1.msra.mxu0 0.0
    %1333 = vmatprep.subr.mxu0 0.0
    %1334 = vmatpush1.msra.mxu0 %v34
    %1335 = vmatprep.subr.mxu0 0.0
    %1336 = vmatpush1.msra.mxu0 %v33
    %1337 = vmatprep.subr.mxu0 0.0
    %1338 = vmatpush1.msra.mxu0 %v32
    %1339 = vmatprep.subr.mxu0 0.0
    %1340 = vmatpush1.msra.mxu0 %v31
    %1341 = vmatprep.subr.mxu0 0.0
    %1342 = vmatpush2.msra.mxu0 0.0
    %1343 = vmatprep.subr.mxu0 0.0
    %1344 = vmatpush2.msra.mxu0 0.0
    %1345 = vmatprep.subr.mxu0 0.0
    %1346 = vmatpush2.msra.mxu0 0.0
    %1347 = vmatprep.subr.mxu0 0.0
    %1348 = vmatpush2.msra.mxu0 0.0
    %1349 = vmatprep.subr.mxu0 0.0
    %1350 = vmatpush2.msra.mxu0 0.0
    %1351 = vmatprep.subr.mxu0 0.0
    %1352 = vmatpush2.msra.mxu0 0.0
    %1353 = vmatprep.subr.mxu0 0.0
    %1354 = vmatpush2.msra.mxu0 0.0
    %1355 = vmatprep.subr.mxu0 0.0
    %1356 = vmatpush2.msra.mxu0 0.0
    %1357 = vmatprep.subr.mxu0 0.0
    %1358 = vmatpush2.msra.mxu0 0.0
    %1359 = vmatprep.subr.mxu0 0.0
    %1360 = vmatpush2.msra.mxu0 0.0
    %1361 = vmatprep.subr.mxu0 0.0
    %1362 = vmatpush2.msra.mxu0 0.0
    %1363 = vmatprep.subr.mxu0 0.0
    %1364 = vmatpush2.msra.mxu0 0.0
    %1365 = vmatprep.subr.mxu0 0.0
    %1366 = vmatpush2.msra.mxu0 0.0
    %1367 = vmatprep.subr.mxu0 0.0
    %1368 = vmatpush2.msra.mxu0 0.0
    %1369 = vmatprep.subr.mxu0 0.0
    %1370 = vmatpush2.msra.mxu0 0.0
    %1371 = vmatprep.subr.mxu0 0.0
    %1372 = vmatpush2.msra.mxu0 0.0
    %1373 = vmatprep.mubr.f32.mxu0 0.0
    %1374 = vmatmul.mubr.f32.gmra.mxu0 %v1307
    %v1375 = vpop.f32.mrf.mxu0
    %v1376 = vadd.f32 %v1301, %v1375
    %v1377 = vpop.f32.mrf.mxu0
    %1378 = vdwg.mxu0
    %v1379 = vadd.f32 %v1376, %v44
    %v1380 = vxor.u32 %v1379, 2147483648
    %v1381 = vmul.f32 %v1380, 1.442695
    %v1382 = vpow.pop %v1381
    %v1383 = vadd.f32 %v1382, 1.0
    %v1384 = vrcp.pop %v1383
    %v1385 = vmul.f32 1.0, %v1384
    %v1386 = vtanh.pop %v1379
    %v1387 = vmul.f32 %v1385, %v1125
    %1389 = vrot.lane.b32.xlu0 %v1386, 64
    %v1390 = vpop.permute.xlu0 %1389
    %v1392 = vmul.f32 %v1385, %v1390
    %1394 = vrot.lane.b32.xlu0 %v1392, 32
    %v1395 = vpop.permute.xlu0 %1394
    %v1397 = vadd.f32 %v1387, %v1395
    %v1398 = vtanh.pop %v1397
    %1400 = vrot.lane.b32.xlu0 %v1398, 64
    %v1401 = vpop.permute.xlu0 %1400
    %v1403 = vmul.f32 %v1385, %v1401
    %s1404 = scalar_lea.vmem %s0, 10
    %v1405 = vld [vmem:[%s1404] sm:$0x3]
    %1406 = vmatprep.subr.mxu0 0.0
    %1407 = vmatpush1.msra.mxu0 0.0
    %1408 = vmatprep.subr.mxu0 0.0
    %1409 = vmatpush1.msra.mxu0 0.0
    %1410 = vmatprep.subr.mxu0 0.0
    %1411 = vmatpush1.msra.mxu0 0.0
    %1412 = vmatprep.subr.mxu0 0.0
    %1413 = vmatpush1.msra.mxu0 0.0
    %1414 = vmatprep.subr.mxu0 0.0
    %1415 = vmatpush1.msra.mxu0 0.0
    %1416 = vmatprep.subr.mxu0 0.0
    %1417 = vmatpush1.msra.mxu0 0.0
    %1418 = vmatprep.subr.mxu0 0.0
    %1419 = vmatpush1.msra.mxu0 0.0
    %1420 = vmatprep.subr.mxu0 0.0
    %1421 = vmatpush1.msra.mxu0 0.0
    %1422 = vmatprep.subr.mxu0 0.0
    %1423 = vmatpush1.msra.mxu0 0.0
    %1424 = vmatprep.subr.mxu0 0.0
    %1425 = vmatpush1.msra.mxu0 0.0
    %1426 = vmatprep.subr.mxu0 0.0
    %1427 = vmatpush1.msra.mxu0 0.0
    %1428 = vmatprep.subr.mxu0 0.0
    %1429 = vmatpush1.msra.mxu0 0.0
    %1430 = vmatprep.subr.mxu0 0.0
    %1431 = vmatpush1.msra.mxu0 %v30
    %1432 = vmatprep.subr.mxu0 0.0
    %1433 = vmatpush1.msra.mxu0 %v29
    %1434 = vmatprep.subr.mxu0 0.0
    %1435 = vmatpush1.msra.mxu0 %v28
    %1436 = vmatprep.subr.mxu0 0.0
    %1437 = vmatpush1.msra.mxu0 %v27
    %1438 = vmatprep.subr.mxu0 0.0
    %1439 = vmatpush2.msra.mxu0 0.0
    %1440 = vmatprep.subr.mxu0 0.0
    %1441 = vmatpush2.msra.mxu0 0.0
    %1442 = vmatprep.subr.mxu0 0.0
    %1443 = vmatpush2.msra.mxu0 0.0
    %1444 = vmatprep.subr.mxu0 0.0
    %1445 = vmatpush2.msra.mxu0 0.0
    %1446 = vmatprep.subr.mxu0 0.0
    %1447 = vmatpush2.msra.mxu0 0.0
    %1448 = vmatprep.subr.mxu0 0.0
    %1449 = vmatpush2.msra.mxu0 0.0
    %1450 = vmatprep.subr.mxu0 0.0
    %1451 = vmatpush2.msra.mxu0 0.0
    %1452 = vmatprep.subr.mxu0 0.0
    %1453 = vmatpush2.msra.mxu0 0.0
    %1454 = vmatprep.subr.mxu0 0.0
    %1455 = vmatpush2.msra.mxu0 0.0
    %1456 = vmatprep.subr.mxu0 0.0
    %1457 = vmatpush2.msra.mxu0 0.0
    %1458 = vmatprep.subr.mxu0 0.0
    %1459 = vmatpush2.msra.mxu0 0.0
    %1460 = vmatprep.subr.mxu0 0.0
    %1461 = vmatpush2.msra.mxu0 0.0
    %1462 = vmatprep.subr.mxu0 0.0
    %1463 = vmatpush2.msra.mxu0 0.0
    %1464 = vmatprep.subr.mxu0 0.0
    %1465 = vmatpush2.msra.mxu0 0.0
    %1466 = vmatprep.subr.mxu0 0.0
    %1467 = vmatpush2.msra.mxu0 0.0
    %1468 = vmatprep.subr.mxu0 0.0
    %1469 = vmatpush2.msra.mxu0 0.0
    %1470 = vmatprep.mubr.f32.mxu0 0.0
    %1471 = vmatmul.mubr.f32.gmra.mxu0 %v1307
    %v1472 = vpop.f32.mrf.mxu0
    %v1473 = vadd.f32 0.0, %v1472
    %v1474 = vpop.f32.mrf.mxu0
    %1475 = vdwg.mxu0
    %v1476 = vadd.f32 %v1405, %v1473
    %v1477 = vxor.u32 %v1476, 2147483648
    %v1478 = vmul.f32 %v1477, 1.442695
    %v1479 = vpow.pop %v1478
    %v1480 = vadd.f32 %v1479, 1.0
    %v1481 = vrcp.pop %v1480
    %v1482 = vmul.f32 1.0, %v1481
    %v1483 = vtanh.pop %v1476
    %v1484 = vmul.f32 %v1482, %v1222
    %1486 = vrot.lane.b32.xlu0 %v1483, 64
    %v1487 = vpop.permute.xlu0 %1486
    %v1489 = vmul.f32 %v1482, %v1487
    %1491 = vrot.lane.b32.xlu0 %v1489, 32
    %v1492 = vpop.permute.xlu0 %1491
    %v1494 = vadd.f32 %v1484, %v1492
    %v1495 = vtanh.pop %v1494
    %1497 = vrot.lane.b32.xlu0 %v1495, 64
    %v1498 = vpop.permute.xlu0 %1497
    %v1500 = vmul.f32 %v1482, %v1498
    %1502 = vrot.lane.b32.xlu0 %v1403, 32
    %v1503 = vpop.permute.xlu0 %1502
    %v1504 = vsel %vm47, %v1503, 0
    %1506 = vmatprep.subr.mxu0 0.0
    %1507 = vmatpush1.msra.mxu0 0.0
    %1508 = vmatprep.subr.mxu0 0.0
    %1509 = vmatpush1.msra.mxu0 0.0
    %1510 = vmatprep.subr.mxu0 0.0
    %1511 = vmatpush1.msra.mxu0 0.0
    %1512 = vmatprep.subr.mxu0 0.0
    %1513 = vmatpush1.msra.mxu0 0.0
    %1514 = vmatprep.subr.mxu0 0.0
    %1515 = vmatpush1.msra.mxu0 0.0
    %1516 = vmatprep.subr.mxu0 0.0
    %1517 = vmatpush1.msra.mxu0 0.0
    %1518 = vmatprep.subr.mxu0 0.0
    %1519 = vmatpush1.msra.mxu0 0.0
    %1520 = vmatprep.subr.mxu0 0.0
    %1521 = vmatpush1.msra.mxu0 0.0
    %1522 = vmatprep.subr.mxu0 0.0
    %1523 = vmatpush1.msra.mxu0 0.0
    %1524 = vmatprep.subr.mxu0 0.0
    %1525 = vmatpush1.msra.mxu0 0.0
    %1526 = vmatprep.subr.mxu0 0.0
    %1527 = vmatpush1.msra.mxu0 0.0
    %1528 = vmatprep.subr.mxu0 0.0
    %1529 = vmatpush1.msra.mxu0 0.0
    %1530 = vmatprep.subr.mxu0 0.0
    %1531 = vmatpush1.msra.mxu0 %v38
    %1532 = vmatprep.subr.mxu0 0.0
    %1533 = vmatpush1.msra.mxu0 %v37
    %1534 = vmatprep.subr.mxu0 0.0
    %1535 = vmatpush1.msra.mxu0 %v36
    %1536 = vmatprep.subr.mxu0 0.0
    %1537 = vmatpush1.msra.mxu0 %v35
    %1538 = vmatprep.subr.mxu0 0.0
    %1539 = vmatpush2.msra.mxu0 0.0
    %1540 = vmatprep.subr.mxu0 0.0
    %1541 = vmatpush2.msra.mxu0 0.0
    %1542 = vmatprep.subr.mxu0 0.0
    %1543 = vmatpush2.msra.mxu0 0.0
    %1544 = vmatprep.subr.mxu0 0.0
    %1545 = vmatpush2.msra.mxu0 0.0
    %1546 = vmatprep.subr.mxu0 0.0
    %1547 = vmatpush2.msra.mxu0 0.0
    %1548 = vmatprep.subr.mxu0 0.0
    %1549 = vmatpush2.msra.mxu0 0.0
    %1550 = vmatprep.subr.mxu0 0.0
    %1551 = vmatpush2.msra.mxu0 0.0
    %1552 = vmatprep.subr.mxu0 0.0
    %1553 = vmatpush2.msra.mxu0 0.0
    %1554 = vmatprep.subr.mxu0 0.0
    %1555 = vmatpush2.msra.mxu0 0.0
    %1556 = vmatprep.subr.mxu0 0.0
    %1557 = vmatpush2.msra.mxu0 0.0
    %1558 = vmatprep.subr.mxu0 0.0
    %1559 = vmatpush2.msra.mxu0 0.0
    %1560 = vmatprep.subr.mxu0 0.0
    %1561 = vmatpush2.msra.mxu0 0.0
    %1562 = vmatprep.subr.mxu0 0.0
    %1563 = vmatpush2.msra.mxu0 0.0
    %1564 = vmatprep.subr.mxu0 0.0
    %1565 = vmatpush2.msra.mxu0 0.0
    %1566 = vmatprep.subr.mxu0 0.0
    %1567 = vmatpush2.msra.mxu0 0.0
    %1568 = vmatprep.subr.mxu0 0.0
    %1569 = vmatpush2.msra.mxu0 0.0
    %1570 = vmatprep.mubr.f32.mxu0 0.0
    %1571 = vmatmul.mubr.f32.gmra.mxu0 %v1504
    %v1572 = vpop.f32.mrf.mxu0
    %v1573 = vadd.f32 0.0, %v1572
    %v1574 = vpop.f32.mrf.mxu0
    %1575 = vdwg.mxu0
    %1577 = vrot.lane.b32.xlu0 %v1500, 32
    %v1578 = vpop.permute.xlu0 %1577
    %v1579 = vsel %vm47, %v1578, 0
    %1581 = vmatprep.subr.mxu0 0.0
    %1582 = vmatpush1.msra.mxu0 0.0
    %1583 = vmatprep.subr.mxu0 0.0
    %1584 = vmatpush1.msra.mxu0 0.0
    %1585 = vmatprep.subr.mxu0 0.0
    %1586 = vmatpush1.msra.mxu0 0.0
    %1587 = vmatprep.subr.mxu0 0.0
    %1588 = vmatpush1.msra.mxu0 0.0
    %1589 = vmatprep.subr.mxu0 0.0
    %1590 = vmatpush1.msra.mxu0 0.0
    %1591 = vmatprep.subr.mxu0 0.0
    %1592 = vmatpush1.msra.mxu0 0.0
    %1593 = vmatprep.subr.mxu0 0.0
    %1594 = vmatpush1.msra.mxu0 0.0
    %1595 = vmatprep.subr.mxu0 0.0
    %1596 = vmatpush1.msra.mxu0 0.0
    %1597 = vmatprep.subr.mxu0 0.0
    %1598 = vmatpush1.msra.mxu0 0.0
    %1599 = vmatprep.subr.mxu0 0.0
    %1600 = vmatpush1.msra.mxu0 0.0
    %1601 = vmatprep.subr.mxu0 0.0
    %1602 = vmatpush1.msra.mxu0 0.0
    %1603 = vmatprep.subr.mxu0 0.0
    %1604 = vmatpush1.msra.mxu0 0.0
    %1605 = vmatprep.subr.mxu0 0.0
    %1606 = vmatpush1.msra.mxu0 %v34
    %1607 = vmatprep.subr.mxu0 0.0
    %1608 = vmatpush1.msra.mxu0 %v33
    %1609 = vmatprep.subr.mxu0 0.0
    %1610 = vmatpush1.msra.mxu0 %v32
    %1611 = vmatprep.subr.mxu0 0.0
    %1612 = vmatpush1.msra.mxu0 %v31
    %1613 = vmatprep.subr.mxu0 0.0
    %1614 = vmatpush2.msra.mxu0 0.0
    %1615 = vmatprep.subr.mxu0 0.0
    %1616 = vmatpush2.msra.mxu0 0.0
    %1617 = vmatprep.subr.mxu0 0.0
    %1618 = vmatpush2.msra.mxu0 0.0
    %1619 = vmatprep.subr.mxu0 0.0
    %1620 = vmatpush2.msra.mxu0 0.0
    %1621 = vmatprep.subr.mxu0 0.0
    %1622 = vmatpush2.msra.mxu0 0.0
    %1623 = vmatprep.subr.mxu0 0.0
    %1624 = vmatpush2.msra.mxu0 0.0
    %1625 = vmatprep.subr.mxu0 0.0
    %1626 = vmatpush2.msra.mxu0 0.0
    %1627 = vmatprep.subr.mxu0 0.0
    %1628 = vmatpush2.msra.mxu0 0.0
    %1629 = vmatprep.subr.mxu0 0.0
    %1630 = vmatpush2.msra.mxu0 0.0
    %1631 = vmatprep.subr.mxu0 0.0
    %1632 = vmatpush2.msra.mxu0 0.0
    %1633 = vmatprep.subr.mxu0 0.0
    %1634 = vmatpush2.msra.mxu0 0.0
    %1635 = vmatprep.subr.mxu0 0.0
    %1636 = vmatpush2.msra.mxu0 0.0
    %1637 = vmatprep.subr.mxu0 0.0
    %1638 = vmatpush2.msra.mxu0 0.0
    %1639 = vmatprep.subr.mxu0 0.0
    %1640 = vmatpush2.msra.mxu0 0.0
    %1641 = vmatprep.subr.mxu0 0.0
    %1642 = vmatpush2.msra.mxu0 0.0
    %1643 = vmatprep.subr.mxu0 0.0
    %1644 = vmatpush2.msra.mxu0 0.0
    %1645 = vmatprep.mubr.f32.mxu0 0.0
    %1646 = vmatmul.mubr.f32.gmra.mxu0 %v1579
    %v1647 = vpop.f32.mrf.mxu0
    %v1648 = vadd.f32 %v1573, %v1647
    %v1649 = vpop.f32.mrf.mxu0
    %1650 = vdwg.mxu0
    %v1651 = vadd.f32 %v1648, %v44
    %v1652 = vxor.u32 %v1651, 2147483648
    %v1653 = vmul.f32 %v1652, 1.442695
    %v1654 = vpow.pop %v1653
    %v1655 = vadd.f32 %v1654, 1.0
    %v1656 = vrcp.pop %v1655
    %v1657 = vmul.f32 1.0, %v1656
    %v1658 = vtanh.pop %v1651
    %v1659 = vmul.f32 %v1657, %v1397
    %1661 = vrot.lane.b32.xlu0 %v1658, 64
    %v1662 = vpop.permute.xlu0 %1661
    %v1664 = vmul.f32 %v1657, %v1662
    %1666 = vrot.lane.b32.xlu0 %v1664, 32
    %v1667 = vpop.permute.xlu0 %1666
    %v1669 = vadd.f32 %v1659, %v1667
    %v1670 = vtanh.pop %v1669
    %1672 = vrot.lane.b32.xlu0 %v1670, 64
    %v1673 = vpop.permute.xlu0 %1672
    %v1675 = vmul.f32 %v1657, %v1673
    %s1676 = scalar_lea.vmem %s0, 12
    %v1677 = vld [vmem:[%s1676] sm:$0x3]
    %1678 = vmatprep.subr.mxu0 0.0
    %1679 = vmatpush1.msra.mxu0 0.0
    %1680 = vmatprep.subr.mxu0 0.0
    %1681 = vmatpush1.msra.mxu0 0.0
    %1682 = vmatprep.subr.mxu0 0.0
    %1683 = vmatpush1.msra.mxu0 0.0
    %1684 = vmatprep.subr.mxu0 0.0
    %1685 = vmatpush1.msra.mxu0 0.0
    %1686 = vmatprep.subr.mxu0 0.0
    %1687 = vmatpush1.msra.mxu0 0.0
    %1688 = vmatprep.subr.mxu0 0.0
    %1689 = vmatpush1.msra.mxu0 0.0
    %1690 = vmatprep.subr.mxu0 0.0
    %1691 = vmatpush1.msra.mxu0 0.0
    %1692 = vmatprep.subr.mxu0 0.0
    %1693 = vmatpush1.msra.mxu0 0.0
    %1694 = vmatprep.subr.mxu0 0.0
    %1695 = vmatpush1.msra.mxu0 0.0
    %1696 = vmatprep.subr.mxu0 0.0
    %1697 = vmatpush1.msra.mxu0 0.0
    %1698 = vmatprep.subr.mxu0 0.0
    %1699 = vmatpush1.msra.mxu0 0.0
    %1700 = vmatprep.subr.mxu0 0.0
    %1701 = vmatpush1.msra.mxu0 0.0
    %1702 = vmatprep.subr.mxu0 0.0
    %1703 = vmatpush1.msra.mxu0 %v30
    %1704 = vmatprep.subr.mxu0 0.0
    %1705 = vmatpush1.msra.mxu0 %v29
    %1706 = vmatprep.subr.mxu0 0.0
    %1707 = vmatpush1.msra.mxu0 %v28
    %1708 = vmatprep.subr.mxu0 0.0
    %1709 = vmatpush1.msra.mxu0 %v27
    %1710 = vmatprep.subr.mxu0 0.0
    %1711 = vmatpush2.msra.mxu0 0.0
    %1712 = vmatprep.subr.mxu0 0.0
    %1713 = vmatpush2.msra.mxu0 0.0
    %1714 = vmatprep.subr.mxu0 0.0
    %1715 = vmatpush2.msra.mxu0 0.0
    %1716 = vmatprep.subr.mxu0 0.0
    %1717 = vmatpush2.msra.mxu0 0.0
    %1718 = vmatprep.subr.mxu0 0.0
    %1719 = vmatpush2.msra.mxu0 0.0
    %1720 = vmatprep.subr.mxu0 0.0
    %1721 = vmatpush2.msra.mxu0 0.0
    %1722 = vmatprep.subr.mxu0 0.0
    %1723 = vmatpush2.msra.mxu0 0.0
    %1724 = vmatprep.subr.mxu0 0.0
    %1725 = vmatpush2.msra.mxu0 0.0
    %1726 = vmatprep.subr.mxu0 0.0
    %1727 = vmatpush2.msra.mxu0 0.0
    %1728 = vmatprep.subr.mxu0 0.0
    %1729 = vmatpush2.msra.mxu0 0.0
    %1730 = vmatprep.subr.mxu0 0.0
    %1731 = vmatpush2.msra.mxu0 0.0
    %1732 = vmatprep.subr.mxu0 0.0
    %1733 = vmatpush2.msra.mxu0 0.0
    %1734 = vmatprep.subr.mxu0 0.0
    %1735 = vmatpush2.msra.mxu0 0.0
    %1736 = vmatprep.subr.mxu0 0.0
    %1737 = vmatpush2.msra.mxu0 0.0
    %1738 = vmatprep.subr.mxu0 0.0
    %1739 = vmatpush2.msra.mxu0 0.0
    %1740 = vmatprep.subr.mxu0 0.0
    %1741 = vmatpush2.msra.mxu0 0.0
    %1742 = vmatprep.mubr.f32.mxu0 0.0
    %1743 = vmatmul.mubr.f32.gmra.mxu0 %v1579
    %v1744 = vpop.f32.mrf.mxu0
    %v1745 = vadd.f32 0.0, %v1744
    %v1746 = vpop.f32.mrf.mxu0
    %1747 = vdwg.mxu0
    %v1748 = vadd.f32 %v1677, %v1745
    %v1749 = vxor.u32 %v1748, 2147483648
    %v1750 = vmul.f32 %v1749, 1.442695
    %v1751 = vpow.pop %v1750
    %v1752 = vadd.f32 %v1751, 1.0
    %v1753 = vrcp.pop %v1752
    %v1754 = vmul.f32 1.0, %v1753
    %v1755 = vtanh.pop %v1748
    %v1756 = vmul.f32 %v1754, %v1494
    %1758 = vrot.lane.b32.xlu0 %v1755, 64
    %v1759 = vpop.permute.xlu0 %1758
    %v1761 = vmul.f32 %v1754, %v1759
    %1763 = vrot.lane.b32.xlu0 %v1761, 32
    %v1764 = vpop.permute.xlu0 %1763
    %v1766 = vadd.f32 %v1756, %v1764
    %v1767 = vtanh.pop %v1766
    %1769 = vrot.lane.b32.xlu0 %v1767, 64
    %v1770 = vpop.permute.xlu0 %1769
    %v1772 = vmul.f32 %v1754, %v1770
    %1774 = vrot.lane.b32.xlu0 %v1675, 32
    %v1775 = vpop.permute.xlu0 %1774
    %v1776 = vsel %vm47, %v1775, 0
    %1778 = vmatprep.subr.mxu0 0.0
    %1779 = vmatpush1.msra.mxu0 0.0
    %1780 = vmatprep.subr.mxu0 0.0
    %1781 = vmatpush1.msra.mxu0 0.0
    %1782 = vmatprep.subr.mxu0 0.0
    %1783 = vmatpush1.msra.mxu0 0.0
    %1784 = vmatprep.subr.mxu0 0.0
    %1785 = vmatpush1.msra.mxu0 0.0
    %1786 = vmatprep.subr.mxu0 0.0
    %1787 = vmatpush1.msra.mxu0 0.0
    %1788 = vmatprep.subr.mxu0 0.0
    %1789 = vmatpush1.msra.mxu0 0.0
    %1790 = vmatprep.subr.mxu0 0.0
    %1791 = vmatpush1.msra.mxu0 0.0
    %1792 = vmatprep.subr.mxu0 0.0
    %1793 = vmatpush1.msra.mxu0 0.0
    %1794 = vmatprep.subr.mxu0 0.0
    %1795 = vmatpush1.msra.mxu0 0.0
    %1796 = vmatprep.subr.mxu0 0.0
    %1797 = vmatpush1.msra.mxu0 0.0
    %1798 = vmatprep.subr.mxu0 0.0
    %1799 = vmatpush1.msra.mxu0 0.0
    %1800 = vmatprep.subr.mxu0 0.0
    %1801 = vmatpush1.msra.mxu0 0.0
    %1802 = vmatprep.subr.mxu0 0.0
    %1803 = vmatpush1.msra.mxu0 %v38
    %1804 = vmatprep.subr.mxu0 0.0
    %1805 = vmatpush1.msra.mxu0 %v37
    %1806 = vmatprep.subr.mxu0 0.0
    %1807 = vmatpush1.msra.mxu0 %v36
    %1808 = vmatprep.subr.mxu0 0.0
    %1809 = vmatpush1.msra.mxu0 %v35
    %1810 = vmatprep.subr.mxu0 0.0
    %1811 = vmatpush2.msra.mxu0 0.0
    %1812 = vmatprep.subr.mxu0 0.0
    %1813 = vmatpush2.msra.mxu0 0.0
    %1814 = vmatprep.subr.mxu0 0.0
    %1815 = vmatpush2.msra.mxu0 0.0
    %1816 = vmatprep.subr.mxu0 0.0
    %1817 = vmatpush2.msra.mxu0 0.0
    %1818 = vmatprep.subr.mxu0 0.0
    %1819 = vmatpush2.msra.mxu0 0.0
    %1820 = vmatprep.subr.mxu0 0.0
    %1821 = vmatpush2.msra.mxu0 0.0
    %1822 = vmatprep.subr.mxu0 0.0
    %1823 = vmatpush2.msra.mxu0 0.0
    %1824 = vmatprep.subr.mxu0 0.0
    %1825 = vmatpush2.msra.mxu0 0.0
    %1826 = vmatprep.subr.mxu0 0.0
    %1827 = vmatpush2.msra.mxu0 0.0
    %1828 = vmatprep.subr.mxu0 0.0
    %1829 = vmatpush2.msra.mxu0 0.0
    %1830 = vmatprep.subr.mxu0 0.0
    %1831 = vmatpush2.msra.mxu0 0.0
    %1832 = vmatprep.subr.mxu0 0.0
    %1833 = vmatpush2.msra.mxu0 0.0
    %1834 = vmatprep.subr.mxu0 0.0
    %1835 = vmatpush2.msra.mxu0 0.0
    %1836 = vmatprep.subr.mxu0 0.0
    %1837 = vmatpush2.msra.mxu0 0.0
    %1838 = vmatprep.subr.mxu0 0.0
    %1839 = vmatpush2.msra.mxu0 0.0
    %1840 = vmatprep.subr.mxu0 0.0
    %1841 = vmatpush2.msra.mxu0 0.0
    %1842 = vmatprep.mubr.f32.mxu0 0.0
    %1843 = vmatmul.mubr.f32.gmra.mxu0 %v1776
    %v1844 = vpop.f32.mrf.mxu0
    %v1845 = vadd.f32 0.0, %v1844
    %v1846 = vpop.f32.mrf.mxu0
    %1847 = vdwg.mxu0
    %1849 = vrot.lane.b32.xlu0 %v1772, 32
    %v1850 = vpop.permute.xlu0 %1849
    %v1851 = vsel %vm47, %v1850, 0
    %1853 = vmatprep.subr.mxu0 0.0
    %1854 = vmatpush1.msra.mxu0 0.0
    %1855 = vmatprep.subr.mxu0 0.0
    %1856 = vmatpush1.msra.mxu0 0.0
    %1857 = vmatprep.subr.mxu0 0.0
    %1858 = vmatpush1.msra.mxu0 0.0
    %1859 = vmatprep.subr.mxu0 0.0
    %1860 = vmatpush1.msra.mxu0 0.0
    %1861 = vmatprep.subr.mxu0 0.0
    %1862 = vmatpush1.msra.mxu0 0.0
    %1863 = vmatprep.subr.mxu0 0.0
    %1864 = vmatpush1.msra.mxu0 0.0
    %1865 = vmatprep.subr.mxu0 0.0
    %1866 = vmatpush1.msra.mxu0 0.0
    %1867 = vmatprep.subr.mxu0 0.0
    %1868 = vmatpush1.msra.mxu0 0.0
    %1869 = vmatprep.subr.mxu0 0.0
    %1870 = vmatpush1.msra.mxu0 0.0
    %1871 = vmatprep.subr.mxu0 0.0
    %1872 = vmatpush1.msra.mxu0 0.0
    %1873 = vmatprep.subr.mxu0 0.0
    %1874 = vmatpush1.msra.mxu0 0.0
    %1875 = vmatprep.subr.mxu0 0.0
    %1876 = vmatpush1.msra.mxu0 0.0
    %1877 = vmatprep.subr.mxu0 0.0
    %1878 = vmatpush1.msra.mxu0 %v34
    %1879 = vmatprep.subr.mxu0 0.0
    %1880 = vmatpush1.msra.mxu0 %v33
    %1881 = vmatprep.subr.mxu0 0.0
    %1882 = vmatpush1.msra.mxu0 %v32
    %1883 = vmatprep.subr.mxu0 0.0
    %1884 = vmatpush1.msra.mxu0 %v31
    %1885 = vmatprep.subr.mxu0 0.0
    %1886 = vmatpush2.msra.mxu0 0.0
    %1887 = vmatprep.subr.mxu0 0.0
    %1888 = vmatpush2.msra.mxu0 0.0
    %1889 = vmatprep.subr.mxu0 0.0
    %1890 = vmatpush2.msra.mxu0 0.0
    %1891 = vmatprep.subr.mxu0 0.0
    %1892 = vmatpush2.msra.mxu0 0.0
    %1893 = vmatprep.subr.mxu0 0.0
    %1894 = vmatpush2.msra.mxu0 0.0
    %1895 = vmatprep.subr.mxu0 0.0
    %1896 = vmatpush2.msra.mxu0 0.0
    %1897 = vmatprep.subr.mxu0 0.0
    %1898 = vmatpush2.msra.mxu0 0.0
    %1899 = vmatprep.subr.mxu0 0.0
    %1900 = vmatpush2.msra.mxu0 0.0
    %1901 = vmatprep.subr.mxu0 0.0
    %1902 = vmatpush2.msra.mxu0 0.0
    %1903 = vmatprep.subr.mxu0 0.0
    %1904 = vmatpush2.msra.mxu0 0.0
    %1905 = vmatprep.subr.mxu0 0.0
    %1906 = vmatpush2.msra.mxu0 0.0
    %1907 = vmatprep.subr.mxu0 0.0
    %1908 = vmatpush2.msra.mxu0 0.0
    %1909 = vmatprep.subr.mxu0 0.0
    %1910 = vmatpush2.msra.mxu0 0.0
    %1911 = vmatprep.subr.mxu0 0.0
    %1912 = vmatpush2.msra.mxu0 0.0
    %1913 = vmatprep.subr.mxu0 0.0
    %1914 = vmatpush2.msra.mxu0 0.0
    %1915 = vmatprep.subr.mxu0 0.0
    %1916 = vmatpush2.msra.mxu0 0.0
    %1917 = vmatprep.mubr.f32.mxu0 0.0
    %1918 = vmatmul.mubr.f32.gmra.mxu0 %v1851
    %v1919 = vpop.f32.mrf.mxu0
    %v1920 = vadd.f32 %v1845, %v1919
    %v1921 = vpop.f32.mrf.mxu0
    %1922 = vdwg.mxu0
    %v1923 = vadd.f32 %v1920, %v44
    %v1924 = vxor.u32 %v1923, 2147483648
    %v1925 = vmul.f32 %v1924, 1.442695
    %v1926 = vpow.pop %v1925
    %v1927 = vadd.f32 %v1926, 1.0
    %v1928 = vrcp.pop %v1927
    %v1929 = vmul.f32 1.0, %v1928
    %v1930 = vtanh.pop %v1923
    %v1931 = vmul.f32 %v1929, %v1669
    %1933 = vrot.lane.b32.xlu0 %v1930, 64
    %v1934 = vpop.permute.xlu0 %1933
    %v1936 = vmul.f32 %v1929, %v1934
    %1938 = vrot.lane.b32.xlu0 %v1936, 32
    %v1939 = vpop.permute.xlu0 %1938
    %v1941 = vadd.f32 %v1931, %v1939
    %v1942 = vtanh.pop %v1941
    %1944 = vrot.lane.b32.xlu0 %v1942, 64
    %v1945 = vpop.permute.xlu0 %1944
    %v1947 = vmul.f32 %v1929, %v1945
    %s1948 = scalar_lea.vmem %s0, 14
    %v1949 = vld [vmem:[%s1948] sm:$0x3]
    %1950 = vmatprep.subr.mxu0 0.0
    %1951 = vmatpush1.msra.mxu0 0.0
    %1952 = vmatprep.subr.mxu0 0.0
    %1953 = vmatpush1.msra.mxu0 0.0
    %1954 = vmatprep.subr.mxu0 0.0
    %1955 = vmatpush1.msra.mxu0 0.0
    %1956 = vmatprep.subr.mxu0 0.0
    %1957 = vmatpush1.msra.mxu0 0.0
    %1958 = vmatprep.subr.mxu0 0.0
    %1959 = vmatpush1.msra.mxu0 0.0
    %1960 = vmatprep.subr.mxu0 0.0
    %1961 = vmatpush1.msra.mxu0 0.0
    %1962 = vmatprep.subr.mxu0 0.0
    %1963 = vmatpush1.msra.mxu0 0.0
    %1964 = vmatprep.subr.mxu0 0.0
    %1965 = vmatpush1.msra.mxu0 0.0
    %1966 = vmatprep.subr.mxu0 0.0
    %1967 = vmatpush1.msra.mxu0 0.0
    %1968 = vmatprep.subr.mxu0 0.0
    %1969 = vmatpush1.msra.mxu0 0.0
    %1970 = vmatprep.subr.mxu0 0.0
    %1971 = vmatpush1.msra.mxu0 0.0
    %1972 = vmatprep.subr.mxu0 0.0
    %1973 = vmatpush1.msra.mxu0 0.0
    %1974 = vmatprep.subr.mxu0 0.0
    %1975 = vmatpush1.msra.mxu0 %v30
    %1976 = vmatprep.subr.mxu0 0.0
    %1977 = vmatpush1.msra.mxu0 %v29
    %1978 = vmatprep.subr.mxu0 0.0
    %1979 = vmatpush1.msra.mxu0 %v28
    %1980 = vmatprep.subr.mxu0 0.0
    %1981 = vmatpush1.msra.mxu0 %v27
    %1982 = vmatprep.subr.mxu0 0.0
    %1983 = vmatpush2.msra.mxu0 0.0
    %1984 = vmatprep.subr.mxu0 0.0
    %1985 = vmatpush2.msra.mxu0 0.0
    %1986 = vmatprep.subr.mxu0 0.0
    %1987 = vmatpush2.msra.mxu0 0.0
    %1988 = vmatprep.subr.mxu0 0.0
    %1989 = vmatpush2.msra.mxu0 0.0
    %1990 = vmatprep.subr.mxu0 0.0
    %1991 = vmatpush2.msra.mxu0 0.0
    %1992 = vmatprep.subr.mxu0 0.0
    %1993 = vmatpush2.msra.mxu0 0.0
    %1994 = vmatprep.subr.mxu0 0.0
    %1995 = vmatpush2.msra.mxu0 0.0
    %1996 = vmatprep.subr.mxu0 0.0
    %1997 = vmatpush2.msra.mxu0 0.0
    %1998 = vmatprep.subr.mxu0 0.0
    %1999 = vmatpush2.msra.mxu0 0.0
    %2000 = vmatprep.subr.mxu0 0.0
    %2001 = vmatpush2.msra.mxu0 0.0
    %2002 = vmatprep.subr.mxu0 0.0
    %2003 = vmatpush2.msra.mxu0 0.0
    %2004 = vmatprep.subr.mxu0 0.0
    %2005 = vmatpush2.msra.mxu0 0.0
    %2006 = vmatprep.subr.mxu0 0.0
    %2007 = vmatpush2.msra.mxu0 0.0
    %2008 = vmatprep.subr.mxu0 0.0
    %2009 = vmatpush2.msra.mxu0 0.0
    %2010 = vmatprep.subr.mxu0 0.0
    %2011 = vmatpush2.msra.mxu0 0.0
    %2012 = vmatprep.subr.mxu0 0.0
    %2013 = vmatpush2.msra.mxu0 0.0
    %2014 = vmatprep.mubr.f32.mxu0 0.0
    %2015 = vmatmul.mubr.f32.gmra.mxu0 %v1851
    %v2016 = vpop.f32.mrf.mxu0
    %v2017 = vadd.f32 0.0, %v2016
    %v2018 = vpop.f32.mrf.mxu0
    %2019 = vdwg.mxu0
    %v2020 = vadd.f32 %v1949, %v2017
    %v2021 = vxor.u32 %v2020, 2147483648
    %v2022 = vmul.f32 %v2021, 1.442695
    %v2023 = vpow.pop %v2022
    %v2024 = vadd.f32 %v2023, 1.0
    %v2025 = vrcp.pop %v2024
    %v2026 = vmul.f32 1.0, %v2025
    %v2027 = vtanh.pop %v2020
    %v2028 = vmul.f32 %v2026, %v1766
    %2030 = vrot.lane.b32.xlu0 %v2027, 64
    %v2031 = vpop.permute.xlu0 %2030
    %v2033 = vmul.f32 %v2026, %v2031
    %2035 = vrot.lane.b32.xlu0 %v2033, 32
    %v2036 = vpop.permute.xlu0 %2035
    %v2038 = vadd.f32 %v2028, %v2036
    %v2039 = vtanh.pop %v2038
    %2041 = vrot.lane.b32.xlu0 %v2039, 64
    %v2042 = vpop.permute.xlu0 %2041
    %v2044 = vmul.f32 %v2026, %v2042
    %2046 = vrot.lane.b32.xlu0 %v1947, 32
    %v2047 = vpop.permute.xlu0 %2046
    %v2048 = vsel %vm47, %v2047, 0
    %2050 = vmatprep.subr.mxu0 0.0
    %2051 = vmatpush1.msra.mxu0 0.0
    %2052 = vmatprep.subr.mxu0 0.0
    %2053 = vmatpush1.msra.mxu0 0.0
    %2054 = vmatprep.subr.mxu0 0.0
    %2055 = vmatpush1.msra.mxu0 0.0
    %2056 = vmatprep.subr.mxu0 0.0
    %2057 = vmatpush1.msra.mxu0 0.0
    %2058 = vmatprep.subr.mxu0 0.0
    %2059 = vmatpush1.msra.mxu0 0.0
    %2060 = vmatprep.subr.mxu0 0.0
    %2061 = vmatpush1.msra.mxu0 0.0
    %2062 = vmatprep.subr.mxu0 0.0
    %2063 = vmatpush1.msra.mxu0 0.0
    %2064 = vmatprep.subr.mxu0 0.0
    %2065 = vmatpush1.msra.mxu0 0.0
    %2066 = vmatprep.subr.mxu0 0.0
    %2067 = vmatpush1.msra.mxu0 0.0
    %2068 = vmatprep.subr.mxu0 0.0
    %2069 = vmatpush1.msra.mxu0 0.0
    %2070 = vmatprep.subr.mxu0 0.0
    %2071 = vmatpush1.msra.mxu0 0.0
    %2072 = vmatprep.subr.mxu0 0.0
    %2073 = vmatpush1.msra.mxu0 0.0
    %2074 = vmatprep.subr.mxu0 0.0
    %2075 = vmatpush1.msra.mxu0 %v38
    %2076 = vmatprep.subr.mxu0 0.0
    %2077 = vmatpush1.msra.mxu0 %v37
    %2078 = vmatprep.subr.mxu0 0.0
    %2079 = vmatpush1.msra.mxu0 %v36
    %2080 = vmatprep.subr.mxu0 0.0
    %2081 = vmatpush1.msra.mxu0 %v35
    %2082 = vmatprep.subr.mxu0 0.0
    %2083 = vmatpush2.msra.mxu0 0.0
    %2084 = vmatprep.subr.mxu0 0.0
    %2085 = vmatpush2.msra.mxu0 0.0
    %2086 = vmatprep.subr.mxu0 0.0
    %2087 = vmatpush2.msra.mxu0 0.0
    %2088 = vmatprep.subr.mxu0 0.0
    %2089 = vmatpush2.msra.mxu0 0.0
    %2090 = vmatprep.subr.mxu0 0.0
    %2091 = vmatpush2.msra.mxu0 0.0
    %2092 = vmatprep.subr.mxu0 0.0
    %2093 = vmatpush2.msra.mxu0 0.0
    %2094 = vmatprep.subr.mxu0 0.0
    %2095 = vmatpush2.msra.mxu0 0.0
    %2096 = vmatprep.subr.mxu0 0.0
    %2097 = vmatpush2.msra.mxu0 0.0
    %2098 = vmatprep.subr.mxu0 0.0
    %2099 = vmatpush2.msra.mxu0 0.0
    %2100 = vmatprep.subr.mxu0 0.0
    %2101 = vmatpush2.msra.mxu0 0.0
    %2102 = vmatprep.subr.mxu0 0.0
    %2103 = vmatpush2.msra.mxu0 0.0
    %2104 = vmatprep.subr.mxu0 0.0
    %2105 = vmatpush2.msra.mxu0 0.0
    %2106 = vmatprep.subr.mxu0 0.0
    %2107 = vmatpush2.msra.mxu0 0.0
    %2108 = vmatprep.subr.mxu0 0.0
    %2109 = vmatpush2.msra.mxu0 0.0
    %2110 = vmatprep.subr.mxu0 0.0
    %2111 = vmatpush2.msra.mxu0 0.0
    %2112 = vmatprep.subr.mxu0 0.0
    %2113 = vmatpush2.msra.mxu0 0.0
    %2114 = vmatprep.mubr.f32.mxu0 0.0
    %2115 = vmatmul.mubr.f32.gmra.mxu0 %v2048
    %v2116 = vpop.f32.mrf.mxu0
    %v2117 = vadd.f32 0.0, %v2116
    %v2118 = vpop.f32.mrf.mxu0
    %2119 = vdwg.mxu0
    %2121 = vrot.lane.b32.xlu0 %v2044, 32
    %v2122 = vpop.permute.xlu0 %2121
    %v2123 = vsel %vm47, %v2122, 0
    %2125 = vmatprep.subr.mxu0 0.0
    %2126 = vmatpush1.msra.mxu0 0.0
    %2127 = vmatprep.subr.mxu0 0.0
    %2128 = vmatpush1.msra.mxu0 0.0
    %2129 = vmatprep.subr.mxu0 0.0
    %2130 = vmatpush1.msra.mxu0 0.0
    %2131 = vmatprep.subr.mxu0 0.0
    %2132 = vmatpush1.msra.mxu0 0.0
    %2133 = vmatprep.subr.mxu0 0.0
    %2134 = vmatpush1.msra.mxu0 0.0
    %2135 = vmatprep.subr.mxu0 0.0
    %2136 = vmatpush1.msra.mxu0 0.0
    %2137 = vmatprep.subr.mxu0 0.0
    %2138 = vmatpush1.msra.mxu0 0.0
    %2139 = vmatprep.subr.mxu0 0.0
    %2140 = vmatpush1.msra.mxu0 0.0
    %2141 = vmatprep.subr.mxu0 0.0
    %2142 = vmatpush1.msra.mxu0 0.0
    %2143 = vmatprep.subr.mxu0 0.0
    %2144 = vmatpush1.msra.mxu0 0.0
    %2145 = vmatprep.subr.mxu0 0.0
    %2146 = vmatpush1.msra.mxu0 0.0
    %2147 = vmatprep.subr.mxu0 0.0
    %2148 = vmatpush1.msra.mxu0 0.0
    %2149 = vmatprep.subr.mxu0 0.0
    %2150 = vmatpush1.msra.mxu0 %v34
    %2151 = vmatprep.subr.mxu0 0.0
    %2152 = vmatpush1.msra.mxu0 %v33
    %2153 = vmatprep.subr.mxu0 0.0
    %2154 = vmatpush1.msra.mxu0 %v32
    %2155 = vmatprep.subr.mxu0 0.0
    %2156 = vmatpush1.msra.mxu0 %v31
    %2157 = vmatprep.subr.mxu0 0.0
    %2158 = vmatpush2.msra.mxu0 0.0
    %2159 = vmatprep.subr.mxu0 0.0
    %2160 = vmatpush2.msra.mxu0 0.0
    %2161 = vmatprep.subr.mxu0 0.0
    %2162 = vmatpush2.msra.mxu0 0.0
    %2163 = vmatprep.subr.mxu0 0.0
    %2164 = vmatpush2.msra.mxu0 0.0
    %2165 = vmatprep.subr.mxu0 0.0
    %2166 = vmatpush2.msra.mxu0 0.0
    %2167 = vmatprep.subr.mxu0 0.0
    %2168 = vmatpush2.msra.mxu0 0.0
    %2169 = vmatprep.subr.mxu0 0.0
    %2170 = vmatpush2.msra.mxu0 0.0
    %2171 = vmatprep.subr.mxu0 0.0
    %2172 = vmatpush2.msra.mxu0 0.0
    %2173 = vmatprep.subr.mxu0 0.0
    %2174 = vmatpush2.msra.mxu0 0.0
    %2175 = vmatprep.subr.mxu0 0.0
    %2176 = vmatpush2.msra.mxu0 0.0
    %2177 = vmatprep.subr.mxu0 0.0
    %2178 = vmatpush2.msra.mxu0 0.0
    %2179 = vmatprep.subr.mxu0 0.0
    %2180 = vmatpush2.msra.mxu0 0.0
    %2181 = vmatprep.subr.mxu0 0.0
    %2182 = vmatpush2.msra.mxu0 0.0
    %2183 = vmatprep.subr.mxu0 0.0
    %2184 = vmatpush2.msra.mxu0 0.0
    %2185 = vmatprep.subr.mxu0 0.0
    %2186 = vmatpush2.msra.mxu0 0.0
    %2187 = vmatprep.subr.mxu0 0.0
    %2188 = vmatpush2.msra.mxu0 0.0
    %2189 = vmatprep.mubr.f32.mxu0 0.0
    %2190 = vmatmul.mubr.f32.gmra.mxu0 %v2123
    %v2191 = vpop.f32.mrf.mxu0
    %v2192 = vadd.f32 %v2117, %v2191
    %v2193 = vpop.f32.mrf.mxu0
    %2194 = vdwg.mxu0
    %v2195 = vadd.f32 %v2192, %v44
    %v2196 = vxor.u32 %v2195, 2147483648
    %v2197 = vmul.f32 %v2196, 1.442695
    %v2198 = vpow.pop %v2197
    %v2199 = vadd.f32 %v2198, 1.0
    %v2200 = vrcp.pop %v2199
    %v2201 = vmul.f32 1.0, %v2200
    %v2202 = vtanh.pop %v2195
    %v2203 = vmul.f32 %v2201, %v1941
    %2205 = vrot.lane.b32.xlu0 %v2202, 64
    %v2206 = vpop.permute.xlu0 %2205
    %v2208 = vmul.f32 %v2201, %v2206
    %2210 = vrot.lane.b32.xlu0 %v2208, 32
    %v2211 = vpop.permute.xlu0 %2210
    %v2213 = vadd.f32 %v2203, %v2211
    %v2214 = vtanh.pop %v2213
    %2216 = vrot.lane.b32.xlu0 %v2214, 64
    %v2217 = vpop.permute.xlu0 %2216
    %v2219 = vmul.f32 %v2201, %v2217
    %v2220 = vld [vmem:[%s5] sm:$0xff]
    %v2221 = vld [vmem:[%s5 + $0x8] sm:$0xff]
    %v2222 = vld [vmem:[%s5 + $0x10] sm:$0xff]
    %v2223 = vld [vmem:[%s5 + $0x18] sm:$0xff]
    %v2224 = vld [vmem:[%s6] sm:$0x1]
    %v2226 = vlaneseq
    %v2227 = vshrl.u32 %v2226, 7
    %v2228 = vsub.s32 0, %v2227
    %v2229 = vrot.slane %v2224, %v2228
    %2232 = vrot.lane.b32.xlu0 %v2219, 32
    %v2233 = vpop.permute.xlu0 %2232
    %v2234 = vsel %vm47, %v2233, 0
    %2236 = vmatprep.subr.mxu0 0.0
    %2237 = vmatpush1.msra.mxu0 0.0
    %2238 = vmatprep.subr.mxu0 0.0
    %2239 = vmatpush1.msra.mxu0 0.0
    %2240 = vmatprep.subr.mxu0 0.0
    %2241 = vmatpush1.msra.mxu0 0.0
    %2242 = vmatprep.subr.mxu0 0.0
    %2243 = vmatpush1.msra.mxu0 0.0
    %2244 = vmatprep.subr.mxu0 0.0
    %2245 = vmatpush1.msra.mxu0 0.0
    %2246 = vmatprep.subr.mxu0 0.0
    %2247 = vmatpush1.msra.mxu0 0.0
    %2248 = vmatprep.subr.mxu0 0.0
    %2249 = vmatpush1.msra.mxu0 0.0
    %2250 = vmatprep.subr.mxu0 0.0
    %2251 = vmatpush1.msra.mxu0 0.0
    %2252 = vmatprep.subr.mxu0 0.0
    %2253 = vmatpush1.msra.mxu0 0.0
    %2254 = vmatprep.subr.mxu0 0.0
    %2255 = vmatpush1.msra.mxu0 0.0
    %2256 = vmatprep.subr.mxu0 0.0
    %2257 = vmatpush1.msra.mxu0 0.0
    %2258 = vmatprep.subr.mxu0 0.0
    %2259 = vmatpush1.msra.mxu0 0.0
    %2260 = vmatprep.subr.mxu0 0.0
    %2261 = vmatpush1.msra.mxu0 %v2223
    %2262 = vmatprep.subr.mxu0 0.0
    %2263 = vmatpush1.msra.mxu0 %v2222
    %2264 = vmatprep.subr.mxu0 0.0
    %2265 = vmatpush1.msra.mxu0 %v2221
    %2266 = vmatprep.subr.mxu0 0.0
    %2267 = vmatpush1.msra.mxu0 %v2220
    %2268 = vmatprep.subr.mxu0 0.0
    %2269 = vmatpush2.msra.mxu0 0.0
    %2270 = vmatprep.subr.mxu0 0.0
    %2271 = vmatpush2.msra.mxu0 0.0
    %2272 = vmatprep.subr.mxu0 0.0
    %2273 = vmatpush2.msra.mxu0 0.0
    %2274 = vmatprep.subr.mxu0 0.0
    %2275 = vmatpush2.msra.mxu0 0.0
    %2276 = vmatprep.subr.mxu0 0.0
    %2277 = vmatpush2.msra.mxu0 0.0
    %2278 = vmatprep.subr.mxu0 0.0
    %2279 = vmatpush2.msra.mxu0 0.0
    %2280 = vmatprep.subr.mxu0 0.0
    %2281 = vmatpush2.msra.mxu0 0.0
    %2282 = vmatprep.subr.mxu0 0.0
    %2283 = vmatpush2.msra.mxu0 0.0
    %2284 = vmatprep.subr.mxu0 0.0
    %2285 = vmatpush2.msra.mxu0 0.0
    %2286 = vmatprep.subr.mxu0 0.0
    %2287 = vmatpush2.msra.mxu0 0.0
    %2288 = vmatprep.subr.mxu0 0.0
    %2289 = vmatpush2.msra.mxu0 0.0
    %2290 = vmatprep.subr.mxu0 0.0
    %2291 = vmatpush2.msra.mxu0 0.0
    %2292 = vmatprep.subr.mxu0 0.0
    %2293 = vmatpush2.msra.mxu0 0.0
    %2294 = vmatprep.subr.mxu0 0.0
    %2295 = vmatpush2.msra.mxu0 0.0
    %2296 = vmatprep.subr.mxu0 0.0
    %2297 = vmatpush2.msra.mxu0 0.0
    %2298 = vmatprep.subr.mxu0 0.0
    %2299 = vmatpush2.msra.mxu0 0.0
    %2300 = vmatprep.mubr.f32.mxu0 0.0
    %2301 = vmatmul.mubr.f32.gmra.mxu0 %v2234
    %v2302 = vpop.f32.mrf.mxu0
    %v2303 = vadd.f32 %v2229, %v2302
    %v2304 = vpop.f32.mrf.mxu0
    %2305 = vdwg.mxu0
    %vm2306 = vcmask 58368
    %2307 = vst.msk [vmem:[#allocation2] sm:$0x3] %vm2306, %v2303
    // Predicated region
    $region30: #{lstm_model_forward.1} parent=1 // pred_check
      _
    $region31: #{lstm_model_forward.1} parent=1 // pred_check_branch
      %2309 = sbr.rel (0) target = $region33
    $region32: #{lstm_model_forward.1} parent=1 // pred_region
      %s2311 = ssub.s32 32, 32
      %2312 = vsyncadd [#allocation3], %s2311
      %s2314 = sshll.u32 [#allocation2], 4
      %s2315 = int_to_ptr.vmem [resolvable:$true] %s2314
      %2317 = dma.vmem_to_hbm [thread:$0]  %s2315, 32, %s7, [#allocation3]
    $region33: #{lstm_model_forward.1} parent=1 // pred_fallthru
      _
    // Predicated region
    $region34: #{lstm_model_forward.1} parent=1 // pred_check
      _
    $region35: #{lstm_model_forward.1} parent=1 // pred_check_branch
      %2319 = sbr.rel (0) target = $region37
    $region36: #{lstm_model_forward.1} parent=1 // pred_region
      %2320 = dma.done [#allocation3], 32
    $region37: #{lstm_model_forward.1} parent=1 // pred_fallthru
      _
    %2321 = vsyncpa [#allocation3], 1

</llo_original>
